<compile_context>
chip_gen: v6e
topology: v6e:2x2x1
jax: 0.10.0
libtpu: 0.0.40
codegen_flags: <defaults>
</compile_context>

<pallas_src>
import functools

import jax
import jax.numpy as jnp
from jax.experimental import pallas as pl
from jax.experimental.pallas import tpu as pltpu


# -----------------------------------------------------------------------------
# Fused kernel helpers
# -----------------------------------------------------------------------------
def _shift_time(x, offset):
    """y[:, t, :] = x[:, t + offset, :] along axis 1 (time), zero at edges."""
    if offset == 0:
        return x
    b, t, c = x.shape
    zeros = jnp.zeros((b, abs(offset), c), x.dtype)
    if offset > 0:
        return jnp.concatenate([x[:, offset:, :], zeros], axis=1)
    return jnp.concatenate([zeros, x[:, :t + offset, :]], axis=1)


# -----------------------------------------------------------------------------
# Single fused kernel: preprocessor -> conv encoder -> classification decoder.
# One grid step = one block of 8 batch rows; everything stays in VMEM/vregs and
# only the [B_blk, 128] lane-padded logits are stored.
# -----------------------------------------------------------------------------
def fused_classification_kernel(frames_ref, basis_ref, mel_ref, *rest,
                                n_layers, kernel_size, tf, n_bins, eps):
    conv_refs = rest[:2 * n_layers]
    dec_w_ref, dec_b_ref, out_ref = rest[2 * n_layers:]

    def mm(x3_bf16, w_bf16):
        # [B, T, C] @ [C, D] -> [B, T, D]; collapse (B, T) so the MXU sees
        # M = B_blk*Tf rows; bf16 operands, f32 accumulation.
        b, t, c = x3_bf16.shape
        y = jnp.dot(x3_bf16.reshape(b * t, c), w_bf16,
                    preferred_element_type=jnp.float32)
        return y.reshape(b, t, w_bf16.shape[-1])

    # --- preprocessor: (pre-windowed basis) |DFT|^2 -> mel -> log -> norm ----
    frames = frames_ref[...].astype(jnp.bfloat16)            # [Bb, Tf, W]
    spec = mm(frames, basis_ref[...])                        # [Bb, Tf, 2F] f32
    re = spec[..., :n_bins]
    im = spec[..., n_bins:]
    power = re * re + im * im                                 # [Bb, Tf, F] f32
    logmel = jnp.log(mm(power.astype(jnp.bfloat16), mel_ref[...]) + 1e-5)

    # per-feature normalization over time (NeMo 'per_feature': unbiased std+eps)
    mean = jnp.mean(logmel, axis=1, keepdims=True)            # [Bb, 1, M]
    var = jnp.sum((logmel - mean) ** 2, axis=1, keepdims=True) / (tf - 1)
    x = (logmel - mean) / (jnp.sqrt(var) + eps)

    # --- encoder: conv1d ('same') as ONE wide-K matmul per layer + BN + ReLU -
    pad = kernel_size // 2
    for li in range(n_layers):
        w_ref = conv_refs[2 * li]                              # [k*Cin, Cout] bf16
        b_ref = conv_refs[2 * li + 1]                          # [1, Cout]     f32
        xb = x.astype(jnp.bfloat16)                            # cast once/layer
        xw = jnp.concatenate(
            [_shift_time(xb, tap - pad) for tap in range(kernel_size)],
            axis=2)                                            # [Bb, Tf, k*Cin]
        y = mm(xw, w_ref[...])                                 # [Bb, Tf, Cout] f32
        x = jnp.maximum(y + b_ref[...], 0.0)

    # --- decoder: mean pool over time -> linear -> (lane-padded) logits ------
    pooled = jnp.mean(x, axis=1)                               # [Bb, C]
    logits = jnp.dot(pooled.astype(jnp.bfloat16), dec_w_ref[...],
                     preferred_element_type=jnp.float32)       # [Bb, Dpad]
    out_ref[...] = logits + dec_b_ref[...]


@functools.partial(jax.jit, static_argnames=("win", "hop", "kernel_size",
                                             "n_layers", "num_classes",
                                             "b_block"))
def classification_forward(audio, params, basis_windowed, mel_fb, *, win, hop,
                           kernel_size, n_layers, num_classes, b_block=8):
    B, L = audio.shape
    tf = 1 + (L - win) // hop
    n_bins = basis_windowed.shape[1] // 2
    d_pad = params["dec_w"].shape[1]

    # Framing in the wrapper: pure layout gather (tiny), keeps the kernel free
    # of unaligned sublane slices and works for any hop/win relationship.
    idx = jnp.arange(tf)[:, None] * hop + jnp.arange(win)[None, :]
    frames = audio[:, idx]                                     # [B, Tf, W] f32

    assert B % b_block == 0
    n_blocks = B // b_block

    conv_args = []
    for li in range(n_layers):
        conv_args += [params[f"conv{li}_w"], params[f"conv{li}_b"]]
    weight_arrays = [basis_windowed, mel_fb] + conv_args + \
                    [params["dec_w"], params["dec_b"]]

    def const_spec(a):
        nd = a.ndim
        return pl.BlockSpec(a.shape, lambda i: (0,) * nd)      # grid-invariant

    kernel = functools.partial(
        fused_classification_kernel, n_layers=n_layers,
        kernel_size=kernel_size, tf=tf, n_bins=n_bins, eps=1e-5)

    logits_pad = pl.pallas_call(
        kernel,
        out_shape=jax.ShapeDtypeStruct((B, d_pad), jnp.float32),
        grid=(n_blocks,),
        in_specs=[pl.BlockSpec((b_block, tf, win), lambda i: (i, 0, 0))]
                 + [const_spec(a) for a in weight_arrays],
        out_specs=pl.BlockSpec((b_block, d_pad), lambda i: (i, 0)),
        compiler_params=pltpu.CompilerParams(
            dimension_semantics=("parallel",)),
    )(frames, *weight_arrays)
    return logits_pad[:, :num_classes]


# -----------------------------------------------------------------------------
# Parameter / basis construction (deterministic, synthetic stand-ins)
# -----------------------------------------------------------------------------
def make_dft_bases(win, n_bins):
    n = jnp.arange(win, dtype=jnp.float32)[:, None]
    f = jnp.arange(n_bins, dtype=jnp.float32)[None, :]
    ang = 2.0 * jnp.pi * n * f / float(win)
    return jnp.cos(ang), jnp.sin(ang)                          # [W, F] each


def make_mel_fb(n_bins, n_mels):
    # linearly spaced triangular filterbank (synthetic stand-in for mel scale)
    pts = jnp.linspace(0.0, n_bins - 1, n_mels + 2)
    f = jnp.arange(n_bins, dtype=jnp.float32)[None, :]
    lower, center, upper = pts[:-2][:, None], pts[1:-1][:, None], pts[2:][:, None]
    up = (f - lower) / (center - lower)
    down = (upper - f) / (upper - center)
    fb = jnp.maximum(0.0, jnp.minimum(up, down))               # [M, F]
    return fb.T                                                # [F, M]


def fold_bn(w, b, gamma, beta, mean, var, eps=1e-5):
    # w: [k, Cin, Cout], b: [Cout]; fold BatchNorm1d running stats into conv
    scale = gamma / jnp.sqrt(var + eps)
    return w * scale[None, None, :], (b - mean) * scale + beta


def init_params(key, n_mels, m_pad, channels, kernel_size, num_classes):
    params = {}
    cin, cin_pad = n_mels, m_pad
    keys = jax.random.split(key, 4 * len(channels) + 2)
    ki = 0
    for li, cout in enumerate(channels):
        w = 0.05 * jax.random.normal(keys[ki], (kernel_size, cin, cout),
                                     jnp.float32); ki += 1
        b = 0.01 * jax.random.normal(keys[ki], (cout,), jnp.float32); ki += 1
        gamma = 1.0 + 0.1 * jax.random.normal(keys[ki], (cout,), jnp.float32); ki += 1
        misc = jax.random.normal(keys[ki], (3, cout), jnp.float32); ki += 1
        beta, mean = 0.01 * misc[0], 0.01 * misc[1]
        var = 1.0 + jnp.abs(0.1 * misc[2])
        w_f, b_f = fold_bn(w, b, gamma, beta, mean, var)
        # zero-pad Cin to lane-dense width, flatten taps into a wide-K matrix
        w_f = jnp.pad(w_f, ((0, 0), (0, cin_pad - cin), (0, 0)))
        params[f"conv{li}_w"] = w_f.reshape(
            kernel_size * cin_pad, cout).astype(jnp.bfloat16)   # [k*Cin, Cout]
        params[f"conv{li}_b"] = b_f[None, :]                    # [1, Cout] f32
        cin, cin_pad = cout, cout
    d_pad = ((num_classes + 127) // 128) * 128                  # lane-dense store
    dec_w = 0.05 * jax.random.normal(keys[ki], (cin, num_classes),
                                     jnp.float32); ki += 1
    dec_b = 0.01 * jax.random.normal(keys[ki], (1, num_classes), jnp.float32)
    params["dec_w"] = jnp.pad(
        dec_w, ((0, 0), (0, d_pad - num_classes))).astype(jnp.bfloat16)
    params["dec_b"] = jnp.pad(dec_b, ((0, 0), (0, d_pad - num_classes)))
    return params


if __name__ == "__main__":
    # small, deterministic synthetic configuration
    B = 16                          # 2 "parallel" grid blocks of 8 rows each
    WIN, HOP = 256, 128
    N_BINS, N_MELS, M_PAD = 128, 64, 128
    CHANNELS = (128, 128)           # two encoder conv blocks
    K = 3
    NUM_CLASSES = 8
    TF = 16
    L = WIN + (TF - 1) * HOP        # audio samples

    key = jax.random.PRNGKey(0)
    k_audio, k_params = jax.random.split(key)
    audio = jax.random.normal(k_audio, (B, L), jnp.float32)

    n = jnp.arange(WIN, dtype=jnp.float32)
    window = 0.5 - 0.5 * jnp.cos(2.0 * jnp.pi * n / WIN)        # Hann [W]
    cos_b, sin_b = make_dft_bases(WIN, N_BINS)
    # window folded into the DFT basis (cos||sin), bf16 MXU operand  [W, 2F]
    basis_windowed = (window[:, None] *
                      jnp.concatenate([cos_b, sin_b], axis=1)).astype(jnp.bfloat16)
    # mel filterbank, zero-padded to a lane-dense 128 output columns  [F, Mpad]
    mel_fb = jnp.pad(make_mel_fb(N_BINS, N_MELS),
                     ((0, 0), (0, M_PAD - N_MELS))).astype(jnp.bfloat16)
    params = init_params(k_params, N_MELS, M_PAD, CHANNELS, K, NUM_CLASSES)

    logits = classification_forward(audio, params, basis_windowed, mel_fb,
                                    win=WIN, hop=HOP, kernel_size=K,
                                    n_layers=len(CHANNELS),
                                    num_classes=NUM_CLASSES, b_block=8)
    logits = jax.block_until_ready(logits)
    assert logits.shape == (B, NUM_CLASSES)
    assert bool(jnp.all(jnp.isfinite(logits)))
    print("KERNEL_OK")
</pallas_src>

<mosaic_0001>
module attributes {stable_mosaic.version = 11 : i64} {
  func.func @fused_classification_kernel(%arg0: i32, %arg1: memref<8x16x256xf32, #tpu.memory_space<vmem>>, %arg2: memref<256x256xbf16, #tpu.memory_space<vmem>>, %arg3: memref<128x128xbf16, #tpu.memory_space<vmem>>, %arg4: memref<384x128xbf16, #tpu.memory_space<vmem>>, %arg5: memref<1x128xf32, #tpu.memory_space<vmem>>, %arg6: memref<384x128xbf16, #tpu.memory_space<vmem>>, %arg7: memref<1x128xf32, #tpu.memory_space<vmem>>, %arg8: memref<128x128xbf16, #tpu.memory_space<vmem>>, %arg9: memref<1x128xf32, #tpu.memory_space<vmem>>, %arg10: memref<8x128xf32, #tpu.memory_space<vmem>>) attributes {dimension_semantics = [#tpu.dimension_semantics<parallel>], iteration_bounds = array<i64: 2>, scalar_prefetch = 0 : i64, scratch_operands = 0 : i64, tpu.core_type = #tpu.core_type<tc>, window_params = [{transform_indices = @transform_0, window_bounds = array<i64: 8, 16, 256>}, {pipeline_mode = #tpu.pipeline_mode<synchronous>, transform_indices = @transform_1, window_bounds = array<i64: 256, 256>}, {pipeline_mode = #tpu.pipeline_mode<synchronous>, transform_indices = @transform_2, window_bounds = array<i64: 128, 128>}, {pipeline_mode = #tpu.pipeline_mode<synchronous>, transform_indices = @transform_3, window_bounds = array<i64: 384, 128>}, {pipeline_mode = #tpu.pipeline_mode<synchronous>, transform_indices = @transform_4, window_bounds = array<i64: 1, 128>}, {pipeline_mode = #tpu.pipeline_mode<synchronous>, transform_indices = @transform_5, window_bounds = array<i64: 384, 128>}, {pipeline_mode = #tpu.pipeline_mode<synchronous>, transform_indices = @transform_6, window_bounds = array<i64: 1, 128>}, {pipeline_mode = #tpu.pipeline_mode<synchronous>, transform_indices = @transform_7, window_bounds = array<i64: 128, 128>}, {pipeline_mode = #tpu.pipeline_mode<synchronous>, transform_indices = @transform_8, window_bounds = array<i64: 1, 128>}, {transform_indices = @transform_9, window_bounds = array<i64: 8, 128>}]} {
    %c0 = arith.constant 0 : index
    %c0_0 = arith.constant 0 : index
    %c0_1 = arith.constant 0 : index
    %0 = vector.load %arg1[%c0, %c0_0, %c0_1] : memref<8x16x256xf32, #tpu.memory_space<vmem>>, vector<8x16x256xf32>
    %1 = arith.truncf %0 : vector<8x16x256xf32> to vector<8x16x256xbf16>
    %c0_2 = arith.constant 0 : index
    %c0_3 = arith.constant 0 : index
    %2 = vector.load %arg2[%c0_2, %c0_3] : memref<256x256xbf16, #tpu.memory_space<vmem>>, vector<256x256xbf16>
    %3 = vector.shape_cast %1 : vector<8x16x256xbf16> to vector<128x256xbf16>
    %cst = arith.constant dense<0.000000e+00> : vector<128x256xf32>
    %4 = tpu.matmul %3, %2, %cst {dimension_numbers = #tpu.dot_dimension_numbers<[1], [0], [0], [1], [0, 0, 1, 1], [], []>} : vector<128x256xbf16>, vector<256x256xbf16>, vector<128x256xf32> -> vector<128x256xf32>
    %5 = vector.shape_cast %4 : vector<128x256xf32> to vector<8x16x256xf32>
    %6 = vector.extract_strided_slice %5 {offsets = [0, 0, 0], sizes = [8, 16, 128], strides = [1, 1, 1]} : vector<8x16x256xf32> to vector<8x16x128xf32>
    %7 = vector.extract_strided_slice %5 {offsets = [0, 0, 128], sizes = [8, 16, 128], strides = [1, 1, 1]} : vector<8x16x256xf32> to vector<8x16x128xf32>
    %8 = arith.mulf %6, %6 : vector<8x16x128xf32>
    %9 = arith.mulf %7, %7 : vector<8x16x128xf32>
    %10 = arith.addf %8, %9 : vector<8x16x128xf32>
    %11 = arith.truncf %10 : vector<8x16x128xf32> to vector<8x16x128xbf16>
    %c0_4 = arith.constant 0 : index
    %c0_5 = arith.constant 0 : index
    %12 = vector.load %arg3[%c0_4, %c0_5] : memref<128x128xbf16, #tpu.memory_space<vmem>>, vector<128x128xbf16>
    %13 = vector.shape_cast %11 : vector<8x16x128xbf16> to vector<128x128xbf16>
    %cst_6 = arith.constant dense<0.000000e+00> : vector<128x128xf32>
    %14 = tpu.matmul %13, %12, %cst_6 {dimension_numbers = #tpu.dot_dimension_numbers<[1], [0], [0], [1], [0, 0, 1, 1], [], []>} : vector<128x128xbf16>, vector<128x128xbf16>, vector<128x128xf32> -> vector<128x128xf32>
    %15 = vector.shape_cast %14 : vector<128x128xf32> to vector<8x16x128xf32>
    %cst_7 = arith.constant 9.99999974E-6 : f32
    %16 = vector.broadcast %cst_7 : f32 to vector<8x16x128xf32>
    %17 = arith.addf %15, %16 : vector<8x16x128xf32>
    %18 = math.log %17 : vector<8x16x128xf32>
    %cst_8 = arith.constant dense<0.000000e+00> : vector<8x128xf32>
    %19 = vector.multi_reduction <add>, %18, %cst_8 [1] : vector<8x16x128xf32> to vector<8x128xf32>
    %20 = vector.shape_cast %19 : vector<8x128xf32> to vector<8x1x128xf32>
    %cst_9 = arith.constant 1.600000e+01 : f32
    %21 = vector.broadcast %cst_9 : f32 to vector<8x1x128xf32>
    %22 = arith.divf %20, %21 : vector<8x1x128xf32>
    %23 = vector.broadcast %22 : vector<8x1x128xf32> to vector<8x16x128xf32>
    %24 = arith.subf %18, %23 : vector<8x16x128xf32>
    %25 = arith.mulf %24, %24 : vector<8x16x128xf32>
    %cst_10 = arith.constant dense<0.000000e+00> : vector<8x128xf32>
    %26 = vector.multi_reduction <add>, %25, %cst_10 [1] : vector<8x16x128xf32> to vector<8x128xf32>
    %27 = vector.shape_cast %26 : vector<8x128xf32> to vector<8x1x128xf32>
    %cst_11 = arith.constant 1.500000e+01 : f32
    %28 = vector.broadcast %cst_11 : f32 to vector<8x1x128xf32>
    %29 = arith.divf %27, %28 : vector<8x1x128xf32>
    %30 = vector.broadcast %22 : vector<8x1x128xf32> to vector<8x16x128xf32>
    %31 = arith.subf %18, %30 : vector<8x16x128xf32>
    %32 = math.sqrt %29 : vector<8x1x128xf32>
    %cst_12 = arith.constant 9.99999974E-6 : f32
    %33 = vector.broadcast %cst_12 : f32 to vector<8x1x128xf32>
    %34 = arith.addf %32, %33 : vector<8x1x128xf32>
    %35 = vector.broadcast %34 : vector<8x1x128xf32> to vector<8x16x128xf32>
    %36 = arith.divf %31, %35 : vector<8x16x128xf32>
    %37 = arith.truncf %36 : vector<8x16x128xf32> to vector<8x16x128xbf16>
    %cst_13 = arith.constant 0.000000e+00 : bf16
    %38 = vector.broadcast %cst_13 : bf16 to vector<8x1x128xbf16>
    %39 = vector.extract_strided_slice %37 {offsets = [0, 0, 0], sizes = [8, 15, 128], strides = [1, 1, 1]} : vector<8x16x128xbf16> to vector<8x15x128xbf16>
    %40 = tpu.concatenate %38, %39 in 1 : vector<8x1x128xbf16>, vector<8x15x128xbf16> -> vector<8x16x128xbf16>
    %cst_14 = arith.constant 0.000000e+00 : bf16
    %41 = vector.broadcast %cst_14 : bf16 to vector<8x1x128xbf16>
    %42 = vector.extract_strided_slice %37 {offsets = [0, 1, 0], sizes = [8, 15, 128], strides = [1, 1, 1]} : vector<8x16x128xbf16> to vector<8x15x128xbf16>
    %43 = tpu.concatenate %42, %41 in 1 : vector<8x15x128xbf16>, vector<8x1x128xbf16> -> vector<8x16x128xbf16>
    %44 = tpu.concatenate %40, %37, %43 in 2 : vector<8x16x128xbf16>, vector<8x16x128xbf16>, vector<8x16x128xbf16> -> vector<8x16x384xbf16>
    %c0_15 = arith.constant 0 : index
    %c0_16 = arith.constant 0 : index
    %45 = vector.load %arg4[%c0_15, %c0_16] : memref<384x128xbf16, #tpu.memory_space<vmem>>, vector<384x128xbf16>
    %46 = vector.shape_cast %44 : vector<8x16x384xbf16> to vector<128x384xbf16>
    %cst_17 = arith.constant dense<0.000000e+00> : vector<128x128xf32>
    %47 = tpu.matmul %46, %45, %cst_17 {dimension_numbers = #tpu.dot_dimension_numbers<[1], [0], [0], [1], [0, 0, 1, 1], [], []>} : vector<128x384xbf16>, vector<384x128xbf16>, vector<128x128xf32> -> vector<128x128xf32>
    %48 = vector.shape_cast %47 : vector<128x128xf32> to vector<8x16x128xf32>
    %c0_18 = arith.constant 0 : index
    %c0_19 = arith.constant 0 : index
    %49 = vector.load %arg5[%c0_18, %c0_19] : memref<1x128xf32, #tpu.memory_space<vmem>>, vector<1x128xf32>
    %50 = vector.shape_cast %49 : vector<1x128xf32> to vector<1x1x128xf32>
    %51 = vector.broadcast %50 : vector<1x1x128xf32> to vector<8x16x128xf32>
    %52 = arith.addf %48, %51 : vector<8x16x128xf32>
    %cst_20 = arith.constant 0.000000e+00 : f32
    %53 = vector.broadcast %cst_20 : f32 to vector<8x16x128xf32>
    %54 = arith.maximumf %52, %53 : vector<8x16x128xf32>
    %55 = arith.truncf %54 : vector<8x16x128xf32> to vector<8x16x128xbf16>
    %cst_21 = arith.constant 0.000000e+00 : bf16
    %56 = vector.broadcast %cst_21 : bf16 to vector<8x1x128xbf16>
    %57 = vector.extract_strided_slice %55 {offsets = [0, 0, 0], sizes = [8, 15, 128], strides = [1, 1, 1]} : vector<8x16x128xbf16> to vector<8x15x128xbf16>
    %58 = tpu.concatenate %56, %57 in 1 : vector<8x1x128xbf16>, vector<8x15x128xbf16> -> vector<8x16x128xbf16>
    %cst_22 = arith.constant 0.000000e+00 : bf16
    %59 = vector.broadcast %cst_22 : bf16 to vector<8x1x128xbf16>
    %60 = vector.extract_strided_slice %55 {offsets = [0, 1, 0], sizes = [8, 15, 128], strides = [1, 1, 1]} : vector<8x16x128xbf16> to vector<8x15x128xbf16>
    %61 = tpu.concatenate %60, %59 in 1 : vector<8x15x128xbf16>, vector<8x1x128xbf16> -> vector<8x16x128xbf16>
    %62 = tpu.concatenate %58, %55, %61 in 2 : vector<8x16x128xbf16>, vector<8x16x128xbf16>, vector<8x16x128xbf16> -> vector<8x16x384xbf16>
    %c0_23 = arith.constant 0 : index
    %c0_24 = arith.constant 0 : index
    %63 = vector.load %arg6[%c0_23, %c0_24] : memref<384x128xbf16, #tpu.memory_space<vmem>>, vector<384x128xbf16>
    %64 = vector.shape_cast %62 : vector<8x16x384xbf16> to vector<128x384xbf16>
    %cst_25 = arith.constant dense<0.000000e+00> : vector<128x128xf32>
    %65 = tpu.matmul %64, %63, %cst_25 {dimension_numbers = #tpu.dot_dimension_numbers<[1], [0], [0], [1], [0, 0, 1, 1], [], []>} : vector<128x384xbf16>, vector<384x128xbf16>, vector<128x128xf32> -> vector<128x128xf32>
    %66 = vector.shape_cast %65 : vector<128x128xf32> to vector<8x16x128xf32>
    %c0_26 = arith.constant 0 : index
    %c0_27 = arith.constant 0 : index
    %67 = vector.load %arg7[%c0_26, %c0_27] : memref<1x128xf32, #tpu.memory_space<vmem>>, vector<1x128xf32>
    %68 = vector.shape_cast %67 : vector<1x128xf32> to vector<1x1x128xf32>
    %69 = vector.broadcast %68 : vector<1x1x128xf32> to vector<8x16x128xf32>
    %70 = arith.addf %66, %69 : vector<8x16x128xf32>
    %cst_28 = arith.constant 0.000000e+00 : f32
    %71 = vector.broadcast %cst_28 : f32 to vector<8x16x128xf32>
    %72 = arith.maximumf %70, %71 : vector<8x16x128xf32>
    %cst_29 = arith.constant dense<0.000000e+00> : vector<8x128xf32>
    %73 = vector.multi_reduction <add>, %72, %cst_29 [1] : vector<8x16x128xf32> to vector<8x128xf32>
    %cst_30 = arith.constant 1.600000e+01 : f32
    %74 = vector.broadcast %cst_30 : f32 to vector<8x128xf32>
    %75 = arith.divf %73, %74 : vector<8x128xf32>
    %76 = arith.truncf %75 : vector<8x128xf32> to vector<8x128xbf16>
    %c0_31 = arith.constant 0 : index
    %c0_32 = arith.constant 0 : index
    %77 = vector.load %arg8[%c0_31, %c0_32] : memref<128x128xbf16, #tpu.memory_space<vmem>>, vector<128x128xbf16>
    %cst_33 = arith.constant dense<0.000000e+00> : vector<8x128xf32>
    %78 = tpu.matmul %76, %77, %cst_33 {dimension_numbers = #tpu.dot_dimension_numbers<[1], [0], [0], [1], [0, 0, 1, 1], [], []>} : vector<8x128xbf16>, vector<128x128xbf16>, vector<8x128xf32> -> vector<8x128xf32>
    %c0_34 = arith.constant 0 : index
    %c0_35 = arith.constant 0 : index
    %79 = vector.load %arg9[%c0_34, %c0_35] : memref<1x128xf32, #tpu.memory_space<vmem>>, vector<1x128xf32>
    %80 = vector.broadcast %79 : vector<1x128xf32> to vector<8x128xf32>
    %81 = arith.addf %78, %80 : vector<8x128xf32>
    %c0_36 = arith.constant 0 : index
    %c0_37 = arith.constant 0 : index
    %82 = vector.load %arg10[%c0_36, %c0_37] : memref<8x128xf32, #tpu.memory_space<vmem>>, vector<8x128xf32>
    tpu.vector_store %arg10[%c0_36, %c0_37], %81 {strides = array<i32>} : memref<8x128xf32, #tpu.memory_space<vmem>>, vector<8x128xf32>,
    return
  }
  func.func @transform_0(%arg0: i32) -> (i32, i32, i32) {
    %c0_i32 = arith.constant 0 : i32
    %c0_i32_0 = arith.constant 0 : i32
    %c0_i32_1 = arith.constant 0 : i32
    return %arg0, %c0_i32, %c0_i32_0 : i32, i32, i32
  }
  func.func @transform_1(%arg0: i32) -> (i32, i32) {
    %c0_i32 = arith.constant 0 : i32
    %c0_i32_0 = arith.constant 0 : i32
    %c0_i32_1 = arith.constant 0 : i32
    return %c0_i32, %c0_i32_0 : i32, i32
  }
  func.func @transform_2(%arg0: i32) -> (i32, i32) {
    %c0_i32 = arith.constant 0 : i32
    %c0_i32_0 = arith.constant 0 : i32
    %c0_i32_1 = arith.constant 0 : i32
    return %c0_i32, %c0_i32_0 : i32, i32
  }
  func.func @transform_3(%arg0: i32) -> (i32, i32) {
    %c0_i32 = arith.constant 0 : i32
    %c0_i32_0 = arith.constant 0 : i32
    %c0_i32_1 = arith.constant 0 : i32
    return %c0_i32, %c0_i32_0 : i32, i32
  }
  func.func @transform_4(%arg0: i32) -> (i32, i32) {
    %c0_i32 = arith.constant 0 : i32
    %c0_i32_0 = arith.constant 0 : i32
    %c0_i32_1 = arith.constant 0 : i32
    return %c0_i32, %c0_i32_0 : i32, i32
  }
  func.func @transform_5(%arg0: i32) -> (i32, i32) {
    %c0_i32 = arith.constant 0 : i32
    %c0_i32_0 = arith.constant 0 : i32
    %c0_i32_1 = arith.constant 0 : i32
    return %c0_i32, %c0_i32_0 : i32, i32
  }
  func.func @transform_6(%arg0: i32) -> (i32, i32) {
    %c0_i32 = arith.constant 0 : i32
    %c0_i32_0 = arith.constant 0 : i32
    %c0_i32_1 = arith.constant 0 : i32
    return %c0_i32, %c0_i32_0 : i32, i32
  }
  func.func @transform_7(%arg0: i32) -> (i32, i32) {
    %c0_i32 = arith.constant 0 : i32
    %c0_i32_0 = arith.constant 0 : i32
    %c0_i32_1 = arith.constant 0 : i32
    return %c0_i32, %c0_i32_0 : i32, i32
  }
  func.func @transform_8(%arg0: i32) -> (i32, i32) {
    %c0_i32 = arith.constant 0 : i32
    %c0_i32_0 = arith.constant 0 : i32
    %c0_i32_1 = arith.constant 0 : i32
    return %c0_i32, %c0_i32_0 : i32, i32
  }
  func.func @transform_9(%arg0: i32) -> (i32, i32) {
    %c0_i32 = arith.constant 0 : i32
    %c0_i32_0 = arith.constant 0 : i32
    return %arg0, %c0_i32 : i32, i32
  }
}

</mosaic_0001>

<llo_original>
// kernel: classification_forward.1
$region0: #{classification_forward.1}
  #allocation0 [shape = 'u32[]', space=smem, size = 0x4, offset = 0x4, fixed_abs, tag = 'smem constant byte address 0x4 - core index']
  #allocation1 [shape = 'u32[144,128]{1,0:T(1,128)}', space=vmem, size = 0x12000, scoped, tag = 'internal scratch']
  %s0 = inlined_call_operand.vmem [shape: f32[16,16,256], index: 0, kind: input, shape index: {}]
  %s1 = inlined_call_operand.vmem [shape: bf16[256,256], index: 1, kind: input, shape index: {}]
  %s2 = inlined_call_operand.vmem [shape: bf16[128,128], index: 2, kind: input, shape index: {}]
  %s3 = inlined_call_operand.vmem [shape: bf16[384,128], index: 3, kind: input, shape index: {}]
  %s4 = inlined_call_operand.vmem [shape: f32[1,128], index: 4, kind: input, shape index: {}]
  %s5 = inlined_call_operand.vmem [shape: bf16[384,128], index: 5, kind: input, shape index: {}]
  %s6 = inlined_call_operand.vmem [shape: f32[1,128], index: 6, kind: input, shape index: {}]
  %s7 = inlined_call_operand.vmem [shape: bf16[128,128], index: 7, kind: input, shape index: {}]
  %s8 = inlined_call_operand.vmem [shape: f32[1,128], index: 8, kind: input, shape index: {}]
  %s9 = inlined_call_operand.vmem [shape: f32[16,128], index: 9, kind: output, shape index: {}]
  %s10 = sld [smem:[#allocation0]]
  $region69: #{classification_forward.1} parent=0
    _
  %s12 = ssub.s32 1, %s10
  %s13 = scalar_select 0, %s12, %s10
  loop: start=0, step=1, limit=4
  $region2: #{classification_forward.1} parent=0 // loop_pre_header
    _
  $region3: #{classification_forward.1} parent=0 // loop_header
    %s15 = sphi 0, %s19
    %p16 = scmp.ge.s32.totalorder %s15, 4
    %s25 = sphi 0, %s27
    %s28 = sphi 0, %s25
    %s29 = sphi 0, %s28
    %s45 = sphi 0, %s29
    %s49 = sphi 0, %s49
    %s51 = sphi 0, %s49
    %s52 = sphi 0, %s51
    %s66 = sphi 0, %s52
    %s70 = sphi 0, %s70
    %s72 = sphi 0, %s70
    %s73 = sphi 0, %s72
    %s87 = sphi 0, %s73
    %s91 = sphi 0, %s91
    %s93 = sphi 0, %s91
    %s94 = sphi 0, %s93
    %s108 = sphi 0, %s94
    %s112 = sphi 0, %s112
    %s114 = sphi 0, %s112
    %s115 = sphi 0, %s114
    %s129 = sphi 0, %s115
    %s133 = sphi 0, %s133
    %s135 = sphi 0, %s133
    %s136 = sphi 0, %s135
    %s150 = sphi 0, %s136
    %s154 = sphi 0, %s154
    %s156 = sphi 0, %s154
    %s157 = sphi 0, %s156
    %s171 = sphi 0, %s157
    %s175 = sphi 0, %s175
    %s177 = sphi 0, %s175
    %s178 = sphi 0, %s177
    %s192 = sphi 0, %s178
    %s196 = sphi 0, %s196
    %s198 = sphi 0, %s196
    %s199 = sphi 0, %s198
    %s213 = sphi 0, %s199
    %s219 = sphi 0, %s221
    %s222 = sphi 0, %s219
    %s223 = sphi 0, %s222
    %s239 = sphi 0, %s223
  $region4: #{classification_forward.1} parent=0 // loop_header_branch
    %18 = sbr.rel (%p16) target = $region8
  $region5: #{classification_forward.1} parent=0 // loop_body
    %s20 = ssub.s32 %s15, 1
    %s21 = ssub.s32 %s15, 2
    %s22 = sadd.s32 %s15, 1
    %s23 = ssub.s32 %s15, %s22
    %p24 = scmp.eq.s32.totalorder %s23, 0
    %s26 = sadd.s32 %s25, 1
    %s27 = scalar_select %p24, %s25, %s26
    %p30 = pneg %p24
    %p31 = scmp.eq.s32.totalorder %s15, 1
    %p32 = por %p30, %p31
    %p33 = scmp.ne.s32.totalorder %s25, %s28
    %p34 = scmp.eq.s32.totalorder %s15, 0
    %p35 = por %p33, %p34
    %p36 = scmp.ne.s32.totalorder %s25, %s28
    %p37 = scmp.eq.s32.totalorder %s20, 1
    %p38 = por %p36, %p37
    %p39 = scmp.ne.s32.totalorder %s28, %s29
    %p40 = scmp.eq.s32.totalorder %s20, 0
    %p41 = por %p39, %p40
    %p42 = scmp.ne.s32.totalorder %s28, %s29
    %p43 = scmp.eq.s32.totalorder %s21, 1
    %p44 = por %p42, %p43
    %p46 = scmp.ne.s32.totalorder %s29, %s45
    %p47 = scmp.eq.s32.totalorder %s21, 0
    %p48 = por %p46, %p47
    %s50 = sadd.s32 %s49, 1
    %p53 = scmp.eq.s32.totalorder %s15, 1
    %p54 = scmp.ne.s32.totalorder %s49, %s51
    %p55 = scmp.eq.s32.totalorder %s15, 0
    %p56 = por %p54, %p55
    %p57 = scmp.ne.s32.totalorder %s49, %s51
    %p58 = scmp.eq.s32.totalorder %s20, 1
    %p59 = por %p57, %p58
    %p60 = scmp.ne.s32.totalorder %s51, %s52
    %p61 = scmp.eq.s32.totalorder %s20, 0
    %p62 = por %p60, %p61
    %p63 = scmp.ne.s32.totalorder %s51, %s52
    %p64 = scmp.eq.s32.totalorder %s21, 1
    %p65 = por %p63, %p64
    %p67 = scmp.ne.s32.totalorder %s52, %s66
    %p68 = scmp.eq.s32.totalorder %s21, 0
    %p69 = por %p67, %p68
    %s71 = sadd.s32 %s70, 1
    %p74 = scmp.eq.s32.totalorder %s15, 1
    %p75 = scmp.ne.s32.totalorder %s70, %s72
    %p76 = scmp.eq.s32.totalorder %s15, 0
    %p77 = por %p75, %p76
    %p78 = scmp.ne.s32.totalorder %s70, %s72
    %p79 = scmp.eq.s32.totalorder %s20, 1
    %p80 = por %p78, %p79
    %p81 = scmp.ne.s32.totalorder %s72, %s73
    %p82 = scmp.eq.s32.totalorder %s20, 0
    %p83 = por %p81, %p82
    %p84 = scmp.ne.s32.totalorder %s72, %s73
    %p85 = scmp.eq.s32.totalorder %s21, 1
    %p86 = por %p84, %p85
    %p88 = scmp.ne.s32.totalorder %s73, %s87
    %p89 = scmp.eq.s32.totalorder %s21, 0
    %p90 = por %p88, %p89
    %s92 = sadd.s32 %s91, 1
    %p95 = scmp.eq.s32.totalorder %s15, 1
    %p96 = scmp.ne.s32.totalorder %s91, %s93
    %p97 = scmp.eq.s32.totalorder %s15, 0
    %p98 = por %p96, %p97
    %p99 = scmp.ne.s32.totalorder %s91, %s93
    %p100 = scmp.eq.s32.totalorder %s20, 1
    %p101 = por %p99, %p100
    %p102 = scmp.ne.s32.totalorder %s93, %s94
    %p103 = scmp.eq.s32.totalorder %s20, 0
    %p104 = por %p102, %p103
    %p105 = scmp.ne.s32.totalorder %s93, %s94
    %p106 = scmp.eq.s32.totalorder %s21, 1
    %p107 = por %p105, %p106
    %p109 = scmp.ne.s32.totalorder %s94, %s108
    %p110 = scmp.eq.s32.totalorder %s21, 0
    %p111 = por %p109, %p110
    %s113 = sadd.s32 %s112, 1
    %p116 = scmp.eq.s32.totalorder %s15, 1
    %p117 = scmp.ne.s32.totalorder %s112, %s114
    %p118 = scmp.eq.s32.totalorder %s15, 0
    %p119 = por %p117, %p118
    %p120 = scmp.ne.s32.totalorder %s112, %s114
    %p121 = scmp.eq.s32.totalorder %s20, 1
    %p122 = por %p120, %p121
    %p123 = scmp.ne.s32.totalorder %s114, %s115
    %p124 = scmp.eq.s32.totalorder %s20, 0
    %p125 = por %p123, %p124
    %p126 = scmp.ne.s32.totalorder %s114, %s115
    %p127 = scmp.eq.s32.totalorder %s21, 1
    %p128 = por %p126, %p127
    %p130 = scmp.ne.s32.totalorder %s115, %s129
    %p131 = scmp.eq.s32.totalorder %s21, 0
    %p132 = por %p130, %p131
    %s134 = sadd.s32 %s133, 1
    %p137 = scmp.eq.s32.totalorder %s15, 1
    %p138 = scmp.ne.s32.totalorder %s133, %s135
    %p139 = scmp.eq.s32.totalorder %s15, 0
    %p140 = por %p138, %p139
    %p141 = scmp.ne.s32.totalorder %s133, %s135
    %p142 = scmp.eq.s32.totalorder %s20, 1
    %p143 = por %p141, %p142
    %p144 = scmp.ne.s32.totalorder %s135, %s136
    %p145 = scmp.eq.s32.totalorder %s20, 0
    %p146 = por %p144, %p145
    %p147 = scmp.ne.s32.totalorder %s135, %s136
    %p148 = scmp.eq.s32.totalorder %s21, 1
    %p149 = por %p147, %p148
    %p151 = scmp.ne.s32.totalorder %s136, %s150
    %p152 = scmp.eq.s32.totalorder %s21, 0
    %p153 = por %p151, %p152
    %s155 = sadd.s32 %s154, 1
    %p158 = scmp.eq.s32.totalorder %s15, 1
    %p159 = scmp.ne.s32.totalorder %s154, %s156
    %p160 = scmp.eq.s32.totalorder %s15, 0
    %p161 = por %p159, %p160
    %p162 = scmp.ne.s32.totalorder %s154, %s156
    %p163 = scmp.eq.s32.totalorder %s20, 1
    %p164 = por %p162, %p163
    %p165 = scmp.ne.s32.totalorder %s156, %s157
    %p166 = scmp.eq.s32.totalorder %s20, 0
    %p167 = por %p165, %p166
    %p168 = scmp.ne.s32.totalorder %s156, %s157
    %p169 = scmp.eq.s32.totalorder %s21, 1
    %p170 = por %p168, %p169
    %p172 = scmp.ne.s32.totalorder %s157, %s171
    %p173 = scmp.eq.s32.totalorder %s21, 0
    %p174 = por %p172, %p173
    %s176 = sadd.s32 %s175, 1
    %p179 = scmp.eq.s32.totalorder %s15, 1
    %p180 = scmp.ne.s32.totalorder %s175, %s177
    %p181 = scmp.eq.s32.totalorder %s15, 0
    %p182 = por %p180, %p181
    %p183 = scmp.ne.s32.totalorder %s175, %s177
    %p184 = scmp.eq.s32.totalorder %s20, 1
    %p185 = por %p183, %p184
    %p186 = scmp.ne.s32.totalorder %s177, %s178
    %p187 = scmp.eq.s32.totalorder %s20, 0
    %p188 = por %p186, %p187
    %p189 = scmp.ne.s32.totalorder %s177, %s178
    %p190 = scmp.eq.s32.totalorder %s21, 1
    %p191 = por %p189, %p190
    %p193 = scmp.ne.s32.totalorder %s178, %s192
    %p194 = scmp.eq.s32.totalorder %s21, 0
    %p195 = por %p193, %p194
    %s197 = sadd.s32 %s196, 1
    %p200 = scmp.eq.s32.totalorder %s15, 1
    %p201 = scmp.ne.s32.totalorder %s196, %s198
    %p202 = scmp.eq.s32.totalorder %s15, 0
    %p203 = por %p201, %p202
    %p204 = scmp.ne.s32.totalorder %s196, %s198
    %p205 = scmp.eq.s32.totalorder %s20, 1
    %p206 = por %p204, %p205
    %p207 = scmp.ne.s32.totalorder %s198, %s199
    %p208 = scmp.eq.s32.totalorder %s20, 0
    %p209 = por %p207, %p208
    %p210 = scmp.ne.s32.totalorder %s198, %s199
    %p211 = scmp.eq.s32.totalorder %s21, 1
    %p212 = por %p210, %p211
    %p214 = scmp.ne.s32.totalorder %s199, %s213
    %p215 = scmp.eq.s32.totalorder %s21, 0
    %p216 = por %p214, %p215
    %s217 = ssub.s32 %s15, %s22
    %p218 = scmp.eq.s32.totalorder %s217, 0
    %s220 = sadd.s32 %s219, 1
    %s221 = scalar_select %p218, %s219, %s220
    %p224 = pneg %p218
    %p225 = scmp.eq.s32.totalorder %s15, 1
    %p226 = por %p224, %p225
    %p227 = scmp.ne.s32.totalorder %s219, %s222
    %p228 = scmp.eq.s32.totalorder %s15, 0
    %p229 = por %p227, %p228
    %p230 = scmp.ne.s32.totalorder %s219, %s222
    %p231 = scmp.eq.s32.totalorder %s20, 1
    %p232 = por %p230, %p231
    %p233 = scmp.ne.s32.totalorder %s222, %s223
    %p234 = scmp.eq.s32.totalorder %s20, 0
    %p235 = por %p233, %p234
    %p236 = scmp.ne.s32.totalorder %s222, %s223
    %p237 = scmp.eq.s32.totalorder %s21, 1
    %p238 = por %p236, %p237
    %p240 = scmp.ne.s32.totalorder %s223, %s239
    %p241 = scmp.eq.s32.totalorder %s21, 0
    %p242 = por %p240, %p241
    %p243 = scmp.le.s32.totalorder 1, %s15
    %p244 = scmp.lt.s32.totalorder %s15, 3
    %p245 = pnand %p243, %p244
    %p246 = pneg %p245
    // Predicated region
    $region9: #{classification_forward.1} parent=5 // pred_check
      _
    $region10: #{classification_forward.1} parent=5 // pred_check_branch
      %248 = sbr.rel (%p245) target = $region12
    $region11: #{classification_forward.1} parent=5 // pred_region
      %s249 = ssub.s32 %s15, 1
      // Predicated region
      $region13: #{classification_forward.1} parent=11 // pred_check
        %p250 = pneg %p62
      $region14: #{classification_forward.1} parent=11 // pred_check_branch
        %252 = sbr.rel (%p250) target = $region16
      $region15: #{classification_forward.1} parent=11 // pred_region
        _
      $region16: #{classification_forward.1} parent=11 // pred_fallthru
        _
      // Predicated region
      $region17: #{classification_forward.1} parent=11 // pred_check
        %p253 = pneg %p83
      $region18: #{classification_forward.1} parent=11 // pred_check_branch
        %255 = sbr.rel (%p253) target = $region20
      $region19: #{classification_forward.1} parent=11 // pred_region
        _
      $region20: #{classification_forward.1} parent=11 // pred_fallthru
        _
      // Predicated region
      $region21: #{classification_forward.1} parent=11 // pred_check
        %p256 = pneg %p104
      $region22: #{classification_forward.1} parent=11 // pred_check_branch
        %258 = sbr.rel (%p256) target = $region24
      $region23: #{classification_forward.1} parent=11 // pred_region
        _
      $region24: #{classification_forward.1} parent=11 // pred_fallthru
        _
      // Predicated region
      $region25: #{classification_forward.1} parent=11 // pred_check
        %p259 = pneg %p125
      $region26: #{classification_forward.1} parent=11 // pred_check_branch
        %261 = sbr.rel (%p259) target = $region28
      $region27: #{classification_forward.1} parent=11 // pred_region
        _
      $region28: #{classification_forward.1} parent=11 // pred_fallthru
        _
      // Predicated region
      $region29: #{classification_forward.1} parent=11 // pred_check
        %p262 = pneg %p146
      $region30: #{classification_forward.1} parent=11 // pred_check_branch
        %264 = sbr.rel (%p262) target = $region32
      $region31: #{classification_forward.1} parent=11 // pred_region
        _
      $region32: #{classification_forward.1} parent=11 // pred_fallthru
        _
      // Predicated region
      $region33: #{classification_forward.1} parent=11 // pred_check
        %p265 = pneg %p167
      $region34: #{classification_forward.1} parent=11 // pred_check_branch
        %267 = sbr.rel (%p265) target = $region36
      $region35: #{classification_forward.1} parent=11 // pred_region
        _
      $region36: #{classification_forward.1} parent=11 // pred_fallthru
        _
      // Predicated region
      $region37: #{classification_forward.1} parent=11 // pred_check
        %p268 = pneg %p188
      $region38: #{classification_forward.1} parent=11 // pred_check_branch
        %270 = sbr.rel (%p268) target = $region40
      $region39: #{classification_forward.1} parent=11 // pred_region
        _
      $region40: #{classification_forward.1} parent=11 // pred_fallthru
        _
      // Predicated region
      $region41: #{classification_forward.1} parent=11 // pred_check
        %p271 = pneg %p209
      $region42: #{classification_forward.1} parent=11 // pred_check_branch
        %273 = sbr.rel (%p271) target = $region44
      $region43: #{classification_forward.1} parent=11 // pred_region
        _
      $region44: #{classification_forward.1} parent=11 // pred_fallthru
        _
    $region12: #{classification_forward.1} parent=5 // pred_fallthru
      _
    %p274 = scmp.lt.s32.totalorder %s15, 2
    // Predicated region
    $region45: #{classification_forward.1} parent=5 // pred_check
      %p275 = pneg %p274
    $region46: #{classification_forward.1} parent=5 // pred_check_branch
      %277 = sbr.rel (%p275) target = $region48
    $region47: #{classification_forward.1} parent=5 // pred_region
      // Predicated region
      $region49: #{classification_forward.1} parent=47 // pred_check
        %p278 = pneg %p35
      $region50: #{classification_forward.1} parent=47 // pred_check_branch
        %280 = sbr.rel (%p278) target = $region52
      $region51: #{classification_forward.1} parent=47 // pred_region
        %s281 = smul.u32 8, %s15
        %p282 = scmp.lt.s32.totalorder %s281, 15
        %s283 = scalar_select %p282, %s281, 15
        %s284 = smul.addr %s283, 4
        %s285 = smul.addr %s284, 8
        %s286 = scalar_lea.vmem %s0, %s285
        %s287 = smul.u32 8, %s15
      $region52: #{classification_forward.1} parent=47 // pred_fallthru
        _
    $region48: #{classification_forward.1} parent=5 // pred_fallthru
      _
    %p288 = scmp.le.s32.totalorder 1, %s15
    %p289 = scmp.lt.s32.totalorder %s15, 3
    %p290 = pnand %p288, %p289
    %p291 = pneg %p290
    // Predicated region
    $region53: #{classification_forward.1} parent=5 // pred_check
      _
    $region54: #{classification_forward.1} parent=5 // pred_check_branch
      %293 = sbr.rel (%p290) target = $region56
    $region55: #{classification_forward.1} parent=5 // pred_region
      %s294 = ssub.s32 %s15, 1
      %s295 = smul.u32 8, %s20
      %p296 = scmp.lt.s32.totalorder %s295, 15
      %s297 = scalar_select %p296, %s295, 15
      %s298 = smul.addr %s297, 4
      %s299 = smul.addr %s298, 8
      %s300 = scalar_lea.vmem %s0, %s299
      %p301 = pneg %p41
      %p302 = pneg %p38
      %p303 = pneg %p62
      %p304 = pneg %p59
      %p305 = pneg %p83
      %p306 = pneg %p80
      %p307 = pneg %p104
      %p308 = pneg %p101
      %p309 = pneg %p125
      %p310 = pneg %p122
      %p311 = pneg %p146
      %p312 = pneg %p143
      %p313 = pneg %p167
      %p314 = pneg %p164
      %p315 = pneg %p188
      %p316 = pneg %p185
      %p317 = pneg %p209
      %p318 = pneg %p206
      %p319 = pneg %p235
      %p320 = pneg %p232
      %p321 = scmp.lt.s32.totalorder %s20, 1
      %s322 = scalar_select %p321, %s20, 1
      %s323 = smul.addr %s322, 8
      %s324 = scalar_lea.vmem %s9, %s323
      %s325 = smul.u32 8, %s20
      %p326 = scmp.lt.s32.totalorder %s325, 15
      %s327 = scalar_select %p326, %s325, 15
      %s328 = smul.addr %s327, 4
      %s329 = smul.addr %s328, 8
      %s330 = scalar_lea.vmem %s0, %s329
      %s331 = smul.u32 8, %s20
      %p332 = scmp.lt.s32.totalorder %s20, 1
      %s333 = scalar_select %p332, %s20, 1
      %s334 = smul.addr %s333, 8
      %s335 = scalar_lea.vmem %s9, %s334
      %v337 = vld [vmem:[%s330] sm:$0xff]
      %v338 = vld [vmem:[%s330 + $0x8] sm:$0xff]
      %v339 = vld [vmem:[%s330 + $0x10] sm:$0xff]
      %v340 = vld [vmem:[%s330 + $0x18] sm:$0xff]
      %v341 = vld [vmem:[%s330 + $0x20] sm:$0xff]
      %v342 = vld [vmem:[%s330 + $0x28] sm:$0xff]
      %v343 = vld [vmem:[%s330 + $0x30] sm:$0xff]
      %v344 = vld [vmem:[%s330 + $0x38] sm:$0xff]
      %v345 = vld [vmem:[%s330 + $0x40] sm:$0xff]
      %v346 = vld [vmem:[%s330 + $0x48] sm:$0xff]
      %v347 = vld [vmem:[%s330 + $0x50] sm:$0xff]
      %v348 = vld [vmem:[%s330 + $0x58] sm:$0xff]
      %v349 = vld [vmem:[%s330 + $0x60] sm:$0xff]
      %v350 = vld [vmem:[%s330 + $0x68] sm:$0xff]
      %v351 = vld [vmem:[%s330 + $0x70] sm:$0xff]
      %v352 = vld [vmem:[%s330 + $0x78] sm:$0xff]
      %v353 = vld [vmem:[%s330 + $0x80] sm:$0xff]
      %v354 = vld [vmem:[%s330 + $0x88] sm:$0xff]
      %v355 = vld [vmem:[%s330 + $0x90] sm:$0xff]
      %v356 = vld [vmem:[%s330 + $0x98] sm:$0xff]
      %v357 = vld [vmem:[%s330 + $0xa0] sm:$0xff]
      %v358 = vld [vmem:[%s330 + $0xa8] sm:$0xff]
      %v359 = vld [vmem:[%s330 + $0xb0] sm:$0xff]
      %v360 = vld [vmem:[%s330 + $0xb8] sm:$0xff]
      %v361 = vld [vmem:[%s330 + $0xc0] sm:$0xff]
      %v362 = vld [vmem:[%s330 + $0xc8] sm:$0xff]
      %v363 = vld [vmem:[%s330 + $0xd0] sm:$0xff]
      %v364 = vld [vmem:[%s330 + $0xd8] sm:$0xff]
      %v365 = vld [vmem:[%s330 + $0xe0] sm:$0xff]
      %v366 = vld [vmem:[%s330 + $0xe8] sm:$0xff]
      %v367 = vld [vmem:[%s330 + $0xf0] sm:$0xff]
      %v368 = vld [vmem:[%s330 + $0xf8] sm:$0xff]
      %v369 = vpack.c.bf16 %v339, %v337
      %v370 = vpack.c.bf16 %v340, %v338
      %v371 = vpack.c.bf16 %v343, %v341
      %v372 = vpack.c.bf16 %v344, %v342
      %v373 = vpack.c.bf16 %v347, %v345
      %v374 = vpack.c.bf16 %v348, %v346
      %v375 = vpack.c.bf16 %v351, %v349
      %v376 = vpack.c.bf16 %v352, %v350
      %v377 = vpack.c.bf16 %v355, %v353
      %v378 = vpack.c.bf16 %v356, %v354
      %v379 = vpack.c.bf16 %v359, %v357
      %v380 = vpack.c.bf16 %v360, %v358
      %v381 = vpack.c.bf16 %v363, %v361
      %v382 = vpack.c.bf16 %v364, %v362
      %v383 = vpack.c.bf16 %v367, %v365
      %v384 = vpack.c.bf16 %v368, %v366
      %v385 = vld [vmem:[%s1] sm:$0xff]
      %v386 = vld [vmem:[%s1 + $0x8] sm:$0xff]
      %v387 = vld [vmem:[%s1 + $0x10] sm:$0xff]
      %v388 = vld [vmem:[%s1 + $0x18] sm:$0xff]
      %v389 = vld [vmem:[%s1 + $0x20] sm:$0xff]
      %v390 = vld [vmem:[%s1 + $0x28] sm:$0xff]
      %v391 = vld [vmem:[%s1 + $0x30] sm:$0xff]
      %v392 = vld [vmem:[%s1 + $0x38] sm:$0xff]
      %v393 = vld [vmem:[%s1 + $0x40] sm:$0xff]
      %v394 = vld [vmem:[%s1 + $0x48] sm:$0xff]
      %v395 = vld [vmem:[%s1 + $0x50] sm:$0xff]
      %v396 = vld [vmem:[%s1 + $0x58] sm:$0xff]
      %v397 = vld [vmem:[%s1 + $0x60] sm:$0xff]
      %v398 = vld [vmem:[%s1 + $0x68] sm:$0xff]
      %v399 = vld [vmem:[%s1 + $0x70] sm:$0xff]
      %v400 = vld [vmem:[%s1 + $0x78] sm:$0xff]
      %v401 = vld [vmem:[%s1 + $0x80] sm:$0xff]
      %v402 = vld [vmem:[%s1 + $0x88] sm:$0xff]
      %v403 = vld [vmem:[%s1 + $0x90] sm:$0xff]
      %v404 = vld [vmem:[%s1 + $0x98] sm:$0xff]
      %v405 = vld [vmem:[%s1 + $0xa0] sm:$0xff]
      %v406 = vld [vmem:[%s1 + $0xa8] sm:$0xff]
      %v407 = vld [vmem:[%s1 + $0xb0] sm:$0xff]
      %v408 = vld [vmem:[%s1 + $0xb8] sm:$0xff]
      %v409 = vld [vmem:[%s1 + $0xc0] sm:$0xff]
      %v410 = vld [vmem:[%s1 + $0xc8] sm:$0xff]
      %v411 = vld [vmem:[%s1 + $0xd0] sm:$0xff]
      %v412 = vld [vmem:[%s1 + $0xd8] sm:$0xff]
      %v413 = vld [vmem:[%s1 + $0xe0] sm:$0xff]
      %v414 = vld [vmem:[%s1 + $0xe8] sm:$0xff]
      %v415 = vld [vmem:[%s1 + $0xf0] sm:$0xff]
      %v416 = vld [vmem:[%s1 + $0xf8] sm:$0xff]
      %v449 = vunpack.c.l.b16 %v385
      %v450 = vunpack.c.h.b16 %v385
      %v451 = vunpack.c.l.b16 %v386
      %v452 = vunpack.c.h.b16 %v386
      %v453 = vunpack.c.l.b16 %v387
      %v454 = vunpack.c.h.b16 %v387
      %v455 = vunpack.c.l.b16 %v388
      %v456 = vunpack.c.h.b16 %v388
      %v457 = vunpack.c.l.b16 %v389
      %v458 = vunpack.c.h.b16 %v389
      %v459 = vunpack.c.l.b16 %v390
      %v460 = vunpack.c.h.b16 %v390
      %v461 = vunpack.c.l.b16 %v391
      %v462 = vunpack.c.h.b16 %v391
      %v463 = vunpack.c.l.b16 %v392
      %v464 = vunpack.c.h.b16 %v392
      %v465 = vunpack.c.l.b16 %v393
      %v466 = vunpack.c.h.b16 %v393
      %v467 = vunpack.c.l.b16 %v394
      %v468 = vunpack.c.h.b16 %v394
      %v469 = vunpack.c.l.b16 %v395
      %v470 = vunpack.c.h.b16 %v395
      %v471 = vunpack.c.l.b16 %v396
      %v472 = vunpack.c.h.b16 %v396
      %v473 = vunpack.c.l.b16 %v397
      %v474 = vunpack.c.h.b16 %v397
      %v475 = vunpack.c.l.b16 %v398
      %v476 = vunpack.c.h.b16 %v398
      %v477 = vunpack.c.l.b16 %v399
      %v478 = vunpack.c.h.b16 %v399
      %v479 = vunpack.c.l.b16 %v400
      %v480 = vunpack.c.h.b16 %v400
      %v481 = vunpack.c.l.b16 %v401
      %v482 = vunpack.c.h.b16 %v401
      %v483 = vunpack.c.l.b16 %v402
      %v484 = vunpack.c.h.b16 %v402
      %v485 = vunpack.c.l.b16 %v403
      %v486 = vunpack.c.h.b16 %v403
      %v487 = vunpack.c.l.b16 %v404
      %v488 = vunpack.c.h.b16 %v404
      %v489 = vunpack.c.l.b16 %v405
      %v490 = vunpack.c.h.b16 %v405
      %v491 = vunpack.c.l.b16 %v406
      %v492 = vunpack.c.h.b16 %v406
      %v493 = vunpack.c.l.b16 %v407
      %v494 = vunpack.c.h.b16 %v407
      %v495 = vunpack.c.l.b16 %v408
      %v496 = vunpack.c.h.b16 %v408
      %v497 = vunpack.c.l.b16 %v409
      %v498 = vunpack.c.h.b16 %v409
      %v499 = vunpack.c.l.b16 %v410
      %v500 = vunpack.c.h.b16 %v410
      %v501 = vunpack.c.l.b16 %v411
      %v502 = vunpack.c.h.b16 %v411
      %v503 = vunpack.c.l.b16 %v412
      %v504 = vunpack.c.h.b16 %v412
      %v505 = vunpack.c.l.b16 %v413
      %v506 = vunpack.c.h.b16 %v413
      %v507 = vunpack.c.l.b16 %v414
      %v508 = vunpack.c.h.b16 %v414
      %v509 = vunpack.c.l.b16 %v415
      %v510 = vunpack.c.h.b16 %v415
      %v511 = vunpack.c.l.b16 %v416
      %v512 = vunpack.c.h.b16 %v416
      %v513 = vpack.c.b16 %v451, %v449
      %v514 = vpack.c.b16 %v452, %v450
      %v515 = vpack.c.b16 %v455, %v453
      %v516 = vpack.c.b16 %v456, %v454
      %v517 = vpack.c.b16 %v459, %v457
      %v518 = vpack.c.b16 %v460, %v458
      %v519 = vpack.c.b16 %v463, %v461
      %v520 = vpack.c.b16 %v464, %v462
      %v521 = vpack.c.b16 %v467, %v465
      %v522 = vpack.c.b16 %v468, %v466
      %v523 = vpack.c.b16 %v471, %v469
      %v524 = vpack.c.b16 %v472, %v470
      %v525 = vpack.c.b16 %v475, %v473
      %v526 = vpack.c.b16 %v476, %v474
      %v527 = vpack.c.b16 %v479, %v477
      %v528 = vpack.c.b16 %v480, %v478
      %v529 = vpack.c.b16 %v483, %v481
      %v530 = vpack.c.b16 %v484, %v482
      %v531 = vpack.c.b16 %v487, %v485
      %v532 = vpack.c.b16 %v488, %v486
      %v533 = vpack.c.b16 %v491, %v489
      %v534 = vpack.c.b16 %v492, %v490
      %v535 = vpack.c.b16 %v495, %v493
      %v536 = vpack.c.b16 %v496, %v494
      %v537 = vpack.c.b16 %v499, %v497
      %v538 = vpack.c.b16 %v500, %v498
      %v539 = vpack.c.b16 %v503, %v501
      %v540 = vpack.c.b16 %v504, %v502
      %v541 = vpack.c.b16 %v507, %v505
      %v542 = vpack.c.b16 %v508, %v506
      %v543 = vpack.c.b16 %v511, %v509
      %v544 = vpack.c.b16 %v512, %v510
      %577 = vmatprep.subr.bf16.mxu0 %v528
      %578 = vmatpush1.bf16.msra.mxu0 %v527
      %579 = vmatprep.subr.bf16.mxu0 %v526
      %580 = vmatpush1.bf16.msra.mxu0 %v525
      %581 = vmatprep.subr.bf16.mxu0 %v524
      %582 = vmatpush1.bf16.msra.mxu0 %v523
      %583 = vmatprep.subr.bf16.mxu0 %v522
      %584 = vmatpush1.bf16.msra.mxu0 %v521
      %585 = vmatprep.subr.bf16.mxu0 %v520
      %586 = vmatpush1.bf16.msra.mxu0 %v519
      %587 = vmatprep.subr.bf16.mxu0 %v518
      %588 = vmatpush1.bf16.msra.mxu0 %v517
      %589 = vmatprep.subr.bf16.mxu0 %v516
      %590 = vmatpush1.bf16.msra.mxu0 %v515
      %591 = vmatprep.subr.bf16.mxu0 %v514
      %592 = vmatpush1.bf16.msra.mxu0 %v513
      %593 = vmatprep.subr.bf16.mxu0 %v544
      %594 = vmatpush2.bf16.msra.mxu0 %v543
      %595 = vmatprep.subr.bf16.mxu0 %v542
      %596 = vmatpush2.bf16.msra.mxu0 %v541
      %597 = vmatprep.subr.bf16.mxu0 %v540
      %598 = vmatpush2.bf16.msra.mxu0 %v539
      %599 = vmatprep.subr.bf16.mxu0 %v538
      %600 = vmatpush2.bf16.msra.mxu0 %v537
      %601 = vmatprep.subr.bf16.mxu0 %v536
      %602 = vmatpush2.bf16.msra.mxu0 %v535
      %603 = vmatprep.subr.bf16.mxu0 %v534
      %604 = vmatpush2.bf16.msra.mxu0 %v533
      %605 = vmatprep.subr.bf16.mxu0 %v532
      %606 = vmatpush2.bf16.msra.mxu0 %v531
      %607 = vmatprep.subr.bf16.mxu0 %v530
      %608 = vmatpush2.bf16.msra.mxu0 %v529
      %609 = vmatprep.mubr.bf16.mxu0 %v370
      %610 = vmatmul.mubr.bf16.gmra.mxu0 %v369
      %v611 = vpop.f32.mrf.mxu0
      %v612 = vadd.f32 0.0, %v611
      %v613 = vpop.f32.mrf.mxu0
      %v614 = vadd.f32 0.0, %v613
      %v615 = vpop.f32.mrf.mxu0
      %v616 = vadd.f32 0.0, %v615
      %v617 = vpop.f32.mrf.mxu0
      %v618 = vadd.f32 0.0, %v617
      %619 = vmatprep.mubr.bf16.mxu0 %v372
      %620 = vmatmul.mubr.bf16.gmra.mxu0 %v371
      %v621 = vpop.f32.mrf.mxu0
      %v622 = vadd.f32 0.0, %v621
      %v623 = vpop.f32.mrf.mxu0
      %v624 = vadd.f32 0.0, %v623
      %v625 = vpop.f32.mrf.mxu0
      %v626 = vadd.f32 0.0, %v625
      %v627 = vpop.f32.mrf.mxu0
      %v628 = vadd.f32 0.0, %v627
      %629 = vmatprep.mubr.bf16.mxu0 %v374
      %630 = vmatmul.mubr.bf16.gmra.mxu0 %v373
      %v631 = vpop.f32.mrf.mxu0
      %v632 = vadd.f32 0.0, %v631
      %v633 = vpop.f32.mrf.mxu0
      %v634 = vadd.f32 0.0, %v633
      %v635 = vpop.f32.mrf.mxu0
      %v636 = vadd.f32 0.0, %v635
      %v637 = vpop.f32.mrf.mxu0
      %v638 = vadd.f32 0.0, %v637
      %639 = vmatprep.mubr.bf16.mxu0 %v376
      %640 = vmatmul.mubr.bf16.gmra.mxu0 %v375
      %v641 = vpop.f32.mrf.mxu0
      %v642 = vadd.f32 0.0, %v641
      %v643 = vpop.f32.mrf.mxu0
      %v644 = vadd.f32 0.0, %v643
      %v645 = vpop.f32.mrf.mxu0
      %v646 = vadd.f32 0.0, %v645
      %v647 = vpop.f32.mrf.mxu0
      %v648 = vadd.f32 0.0, %v647
      %649 = vmatprep.mubr.bf16.mxu0 %v378
      %650 = vmatmul.mubr.bf16.gmra.mxu0 %v377
      %v651 = vpop.f32.mrf.mxu0
      %v652 = vadd.f32 0.0, %v651
      %v653 = vpop.f32.mrf.mxu0
      %v654 = vadd.f32 0.0, %v653
      %v655 = vpop.f32.mrf.mxu0
      %v656 = vadd.f32 0.0, %v655
      %v657 = vpop.f32.mrf.mxu0
      %v658 = vadd.f32 0.0, %v657
      %659 = vmatprep.mubr.bf16.mxu0 %v380
      %660 = vmatmul.mubr.bf16.gmra.mxu0 %v379
      %v661 = vpop.f32.mrf.mxu0
      %v662 = vadd.f32 0.0, %v661
      %v663 = vpop.f32.mrf.mxu0
      %v664 = vadd.f32 0.0, %v663
      %v665 = vpop.f32.mrf.mxu0
      %v666 = vadd.f32 0.0, %v665
      %v667 = vpop.f32.mrf.mxu0
      %v668 = vadd.f32 0.0, %v667
      %669 = vmatprep.mubr.bf16.mxu0 %v382
      %670 = vmatmul.mubr.bf16.gmra.mxu0 %v381
      %v671 = vpop.f32.mrf.mxu0
      %v672 = vadd.f32 0.0, %v671
      %v673 = vpop.f32.mrf.mxu0
      %v674 = vadd.f32 0.0, %v673
      %v675 = vpop.f32.mrf.mxu0
      %v676 = vadd.f32 0.0, %v675
      %v677 = vpop.f32.mrf.mxu0
      %v678 = vadd.f32 0.0, %v677
      %679 = vmatprep.mubr.bf16.mxu0 %v384
      %680 = vmatmul.mubr.bf16.gmra.mxu0 %v383
      %v681 = vpop.f32.mrf.mxu0
      %v682 = vadd.f32 0.0, %v681
      %v683 = vpop.f32.mrf.mxu0
      %v684 = vadd.f32 0.0, %v683
      %v685 = vpop.f32.mrf.mxu0
      %v686 = vadd.f32 0.0, %v685
      %v687 = vpop.f32.mrf.mxu0
      %v688 = vadd.f32 0.0, %v687
      %689 = vdwg.mxu0
      %v690 = vmul.f32 %v612, %v612
      %v691 = vmul.f32 %v616, %v616
      %v692 = vmul.f32 %v622, %v622
      %v693 = vmul.f32 %v626, %v626
      %v694 = vmul.f32 %v632, %v632
      %v695 = vmul.f32 %v636, %v636
      %v696 = vmul.f32 %v642, %v642
      %v697 = vmul.f32 %v646, %v646
      %v698 = vmul.f32 %v652, %v652
      %v699 = vmul.f32 %v656, %v656
      %v700 = vmul.f32 %v662, %v662
      %v701 = vmul.f32 %v666, %v666
      %v702 = vmul.f32 %v672, %v672
      %v703 = vmul.f32 %v676, %v676
      %v704 = vmul.f32 %v682, %v682
      %v705 = vmul.f32 %v686, %v686
      %v706 = vmul.f32 %v614, %v614
      %v707 = vmul.f32 %v618, %v618
      %v708 = vmul.f32 %v624, %v624
      %v709 = vmul.f32 %v628, %v628
      %v710 = vmul.f32 %v634, %v634
      %v711 = vmul.f32 %v638, %v638
      %v712 = vmul.f32 %v644, %v644
      %v713 = vmul.f32 %v648, %v648
      %v714 = vmul.f32 %v654, %v654
      %v715 = vmul.f32 %v658, %v658
      %v716 = vmul.f32 %v664, %v664
      %v717 = vmul.f32 %v668, %v668
      %v718 = vmul.f32 %v674, %v674
      %v719 = vmul.f32 %v678, %v678
      %v720 = vmul.f32 %v684, %v684
      %v721 = vmul.f32 %v688, %v688
      %v722 = vadd.f32 %v690, %v706
      %v723 = vadd.f32 %v691, %v707
      %v724 = vadd.f32 %v692, %v708
      %v725 = vadd.f32 %v693, %v709
      %v726 = vadd.f32 %v694, %v710
      %v727 = vadd.f32 %v695, %v711
      %v728 = vadd.f32 %v696, %v712
      %v729 = vadd.f32 %v697, %v713
      %v730 = vadd.f32 %v698, %v714
      %v731 = vadd.f32 %v699, %v715
      %v732 = vadd.f32 %v700, %v716
      %v733 = vadd.f32 %v701, %v717
      %v734 = vadd.f32 %v702, %v718
      %v735 = vadd.f32 %v703, %v719
      %v736 = vadd.f32 %v704, %v720
      %v737 = vadd.f32 %v705, %v721
      %v738 = vpack.c.bf16 %v723, %v722
      %v739 = vpack.c.bf16 %v725, %v724
      %v740 = vpack.c.bf16 %v727, %v726
      %v741 = vpack.c.bf16 %v729, %v728
      %v742 = vpack.c.bf16 %v731, %v730
      %v743 = vpack.c.bf16 %v733, %v732
      %v744 = vpack.c.bf16 %v735, %v734
      %v745 = vpack.c.bf16 %v737, %v736
      %v746 = vld [vmem:[%s2] sm:$0xf]
      %v747 = vld [vmem:[%s2 + $0x4] sm:$0xf]
      %v748 = vld [vmem:[%s2 + $0x8] sm:$0xf]
      %v749 = vld [vmem:[%s2 + $0xc] sm:$0xf]
      %v750 = vld [vmem:[%s2 + $0x10] sm:$0xf]
      %v751 = vld [vmem:[%s2 + $0x14] sm:$0xf]
      %v752 = vld [vmem:[%s2 + $0x18] sm:$0xf]
      %v753 = vld [vmem:[%s2 + $0x1c] sm:$0xf]
      %v754 = vld [vmem:[%s2 + $0x20] sm:$0xf]
      %v755 = vld [vmem:[%s2 + $0x24] sm:$0xf]
      %v756 = vld [vmem:[%s2 + $0x28] sm:$0xf]
      %v757 = vld [vmem:[%s2 + $0x2c] sm:$0xf]
      %v758 = vld [vmem:[%s2 + $0x30] sm:$0xf]
      %v759 = vld [vmem:[%s2 + $0x34] sm:$0xf]
      %v760 = vld [vmem:[%s2 + $0x38] sm:$0xf]
      %v761 = vld [vmem:[%s2 + $0x3c] sm:$0xf]
      %v778 = vunpack.c.l.b16 %v746
      %v779 = vunpack.c.l.b16 %v747
      %v780 = vunpack.c.l.b16 %v748
      %v781 = vunpack.c.l.b16 %v749
      %v782 = vunpack.c.l.b16 %v750
      %v783 = vunpack.c.l.b16 %v751
      %v784 = vunpack.c.l.b16 %v752
      %v785 = vunpack.c.l.b16 %v753
      %v786 = vunpack.c.l.b16 %v754
      %v787 = vunpack.c.l.b16 %v755
      %v788 = vunpack.c.l.b16 %v756
      %v789 = vunpack.c.l.b16 %v757
      %v790 = vunpack.c.l.b16 %v758
      %v791 = vunpack.c.l.b16 %v759
      %v792 = vunpack.c.l.b16 %v760
      %v793 = vunpack.c.l.b16 %v761
      %v794 = vpack.c.b16 %v779, %v778
      %v795 = vpack.c.b16 %v781, %v780
      %v796 = vpack.c.b16 %v783, %v782
      %v797 = vpack.c.b16 %v785, %v784
      %v798 = vpack.c.b16 %v787, %v786
      %v799 = vpack.c.b16 %v789, %v788
      %v800 = vpack.c.b16 %v791, %v790
      %v801 = vpack.c.b16 %v793, %v792
      %810 = vmatprep.subr.bf16.mxu0 0
      %811 = vmatpush1.bf16.msra.mxu0 %v801
      %812 = vmatprep.subr.bf16.mxu0 0
      %813 = vmatpush1.bf16.msra.mxu0 %v800
      %814 = vmatprep.subr.bf16.mxu0 0
      %815 = vmatpush1.bf16.msra.mxu0 %v799
      %816 = vmatprep.subr.bf16.mxu0 0
      %817 = vmatpush1.bf16.msra.mxu0 %v798
      %818 = vmatprep.subr.bf16.mxu0 0
      %819 = vmatpush1.bf16.msra.mxu0 %v797
      %820 = vmatprep.subr.bf16.mxu0 0
      %821 = vmatpush1.bf16.msra.mxu0 %v796
      %822 = vmatprep.subr.bf16.mxu0 0
      %823 = vmatpush1.bf16.msra.mxu0 %v795
      %824 = vmatprep.subr.bf16.mxu0 0
      %825 = vmatpush1.bf16.msra.mxu0 %v794
      %826 = vmatprep.subr.bf16.mxu0 0
      %827 = vmatpush2.bf16.msra.mxu0 0
      %828 = vmatprep.subr.bf16.mxu0 0
      %829 = vmatpush2.bf16.msra.mxu0 0
      %830 = vmatprep.subr.bf16.mxu0 0
      %831 = vmatpush2.bf16.msra.mxu0 0
      %832 = vmatprep.subr.bf16.mxu0 0
      %833 = vmatpush2.bf16.msra.mxu0 0
      %834 = vmatprep.subr.bf16.mxu0 0
      %835 = vmatpush2.bf16.msra.mxu0 0
      %836 = vmatprep.subr.bf16.mxu0 0
      %837 = vmatpush2.bf16.msra.mxu0 0
      %838 = vmatprep.subr.bf16.mxu0 0
      %839 = vmatpush2.bf16.msra.mxu0 0
      %840 = vmatprep.subr.bf16.mxu0 0
      %841 = vmatpush2.bf16.msra.mxu0 0
      %842 = vmatprep.mubr.bf16.mxu0 0
      %843 = vmatmul.mubr.bf16.gmra.mxu0 %v738
      %v844 = vpop.f32.mrf.mxu0
      %v845 = vadd.f32 0.0, %v844
      %v846 = vpop.f32.mrf.mxu0
      %v847 = vpop.f32.mrf.mxu0
      %v848 = vadd.f32 0.0, %v847
      %v849 = vpop.f32.mrf.mxu0
      %850 = vmatprep.mubr.bf16.mxu0 0
      %851 = vmatmul.mubr.bf16.gmra.mxu0 %v739
      %v852 = vpop.f32.mrf.mxu0
      %v853 = vadd.f32 0.0, %v852
      %v854 = vpop.f32.mrf.mxu0
      %v855 = vpop.f32.mrf.mxu0
      %v856 = vadd.f32 0.0, %v855
      %v857 = vpop.f32.mrf.mxu0
      %858 = vmatprep.mubr.bf16.mxu0 0
      %859 = vmatmul.mubr.bf16.gmra.mxu0 %v740
      %v860 = vpop.f32.mrf.mxu0
      %v861 = vadd.f32 0.0, %v860
      %v862 = vpop.f32.mrf.mxu0
      %v863 = vpop.f32.mrf.mxu0
      %v864 = vadd.f32 0.0, %v863
      %v865 = vpop.f32.mrf.mxu0
      %866 = vmatprep.mubr.bf16.mxu0 0
      %867 = vmatmul.mubr.bf16.gmra.mxu0 %v741
      %v868 = vpop.f32.mrf.mxu0
      %v869 = vadd.f32 0.0, %v868
      %v870 = vpop.f32.mrf.mxu0
      %v871 = vpop.f32.mrf.mxu0
      %v872 = vadd.f32 0.0, %v871
      %v873 = vpop.f32.mrf.mxu0
      %874 = vmatprep.mubr.bf16.mxu0 0
      %875 = vmatmul.mubr.bf16.gmra.mxu0 %v742
      %v876 = vpop.f32.mrf.mxu0
      %v877 = vadd.f32 0.0, %v876
      %v878 = vpop.f32.mrf.mxu0
      %v879 = vpop.f32.mrf.mxu0
      %v880 = vadd.f32 0.0, %v879
      %v881 = vpop.f32.mrf.mxu0
      %882 = vmatprep.mubr.bf16.mxu0 0
      %883 = vmatmul.mubr.bf16.gmra.mxu0 %v743
      %v884 = vpop.f32.mrf.mxu0
      %v885 = vadd.f32 0.0, %v884
      %v886 = vpop.f32.mrf.mxu0
      %v887 = vpop.f32.mrf.mxu0
      %v888 = vadd.f32 0.0, %v887
      %v889 = vpop.f32.mrf.mxu0
      %890 = vmatprep.mubr.bf16.mxu0 0
      %891 = vmatmul.mubr.bf16.gmra.mxu0 %v744
      %v892 = vpop.f32.mrf.mxu0
      %v893 = vadd.f32 0.0, %v892
      %v894 = vpop.f32.mrf.mxu0
      %v895 = vpop.f32.mrf.mxu0
      %v896 = vadd.f32 0.0, %v895
      %v897 = vpop.f32.mrf.mxu0
      %898 = vmatprep.mubr.bf16.mxu0 0
      %899 = vmatmul.mubr.bf16.gmra.mxu0 %v745
      %v900 = vpop.f32.mrf.mxu0
      %v901 = vadd.f32 0.0, %v900
      %v902 = vpop.f32.mrf.mxu0
      %v903 = vpop.f32.mrf.mxu0
      %v904 = vadd.f32 0.0, %v903
      %v905 = vpop.f32.mrf.mxu0
      %906 = vdwg.mxu0
      %v907 = vadd.f32 %v845, 1e-05
      %v908 = vadd.f32 %v848, 1e-05
      %v909 = vadd.f32 %v853, 1e-05
      %v910 = vadd.f32 %v856, 1e-05
      %v911 = vadd.f32 %v861, 1e-05
      %v912 = vadd.f32 %v864, 1e-05
      %v913 = vadd.f32 %v869, 1e-05
      %v914 = vadd.f32 %v872, 1e-05
      %v915 = vadd.f32 %v877, 1e-05
      %v916 = vadd.f32 %v880, 1e-05
      %v917 = vadd.f32 %v885, 1e-05
      %v918 = vadd.f32 %v888, 1e-05
      %v919 = vadd.f32 %v893, 1e-05
      %v920 = vadd.f32 %v896, 1e-05
      %v921 = vadd.f32 %v901, 1e-05
      %v922 = vadd.f32 %v904, 1e-05
      %v923 = vlog2.pop %v907
      %v924 = vmul.f32 %v923, 0.6931472
      %v925 = vlog2.pop %v908
      %v926 = vmul.f32 %v925, 0.6931472
      %v927 = vlog2.pop %v909
      %v928 = vmul.f32 %v927, 0.6931472
      %v929 = vlog2.pop %v910
      %v930 = vmul.f32 %v929, 0.6931472
      %v931 = vlog2.pop %v911
      %v932 = vmul.f32 %v931, 0.6931472
      %v933 = vlog2.pop %v912
      %v934 = vmul.f32 %v933, 0.6931472
      %v935 = vlog2.pop %v913
      %v936 = vmul.f32 %v935, 0.6931472
      %v937 = vlog2.pop %v914
      %v938 = vmul.f32 %v937, 0.6931472
      %v939 = vlog2.pop %v915
      %v940 = vmul.f32 %v939, 0.6931472
      %v941 = vlog2.pop %v916
      %v942 = vmul.f32 %v941, 0.6931472
      %v943 = vlog2.pop %v917
      %v944 = vmul.f32 %v943, 0.6931472
      %v945 = vlog2.pop %v918
      %v946 = vmul.f32 %v945, 0.6931472
      %v947 = vlog2.pop %v919
      %v948 = vmul.f32 %v947, 0.6931472
      %v949 = vlog2.pop %v920
      %v950 = vmul.f32 %v949, 0.6931472
      %v951 = vlog2.pop %v921
      %v952 = vmul.f32 %v951, 0.6931472
      %v953 = vlog2.pop %v922
      %v954 = vmul.f32 %v953, 0.6931472
      %v955 = vadd.f32 %v924, %v926
      %v956 = vrot.slane %v955, 4
      %v957 = vadd.f32 %v955, %v956
      %v958 = vrot.slane %v957, 2
      %v959 = vadd.f32 %v957, %v958
      %v960 = vrot.slane %v959, 1
      %v961 = vadd.f32 %v959, %v960
      %v962 = vadd.f32 %v928, %v930
      %v963 = vrot.slane %v962, 4
      %v964 = vadd.f32 %v962, %v963
      %v965 = vrot.slane %v964, 2
      %v966 = vadd.f32 %v964, %v965
      %v967 = vrot.slane %v966, 1
      %v968 = vadd.f32 %v966, %v967
      %v969 = vadd.f32 %v932, %v934
      %v970 = vrot.slane %v969, 4
      %v971 = vadd.f32 %v969, %v970
      %v972 = vrot.slane %v971, 2
      %v973 = vadd.f32 %v971, %v972
      %v974 = vrot.slane %v973, 1
      %v975 = vadd.f32 %v973, %v974
      %v976 = vadd.f32 %v936, %v938
      %v977 = vrot.slane %v976, 4
      %v978 = vadd.f32 %v976, %v977
      %v979 = vrot.slane %v978, 2
      %v980 = vadd.f32 %v978, %v979
      %v981 = vrot.slane %v980, 1
      %v982 = vadd.f32 %v980, %v981
      %v983 = vadd.f32 %v940, %v942
      %v984 = vrot.slane %v983, 4
      %v985 = vadd.f32 %v983, %v984
      %v986 = vrot.slane %v985, 2
      %v987 = vadd.f32 %v985, %v986
      %v988 = vrot.slane %v987, 1
      %v989 = vadd.f32 %v987, %v988
      %v990 = vadd.f32 %v944, %v946
      %v991 = vrot.slane %v990, 4
      %v992 = vadd.f32 %v990, %v991
      %v993 = vrot.slane %v992, 2
      %v994 = vadd.f32 %v992, %v993
      %v995 = vrot.slane %v994, 1
      %v996 = vadd.f32 %v994, %v995
      %v997 = vadd.f32 %v948, %v950
      %v998 = vrot.slane %v997, 4
      %v999 = vadd.f32 %v997, %v998
      %v1000 = vrot.slane %v999, 2
      %v1001 = vadd.f32 %v999, %v1000
      %v1002 = vrot.slane %v1001, 1
      %v1003 = vadd.f32 %v1001, %v1002
      %v1004 = vadd.f32 %v952, %v954
      %v1005 = vrot.slane %v1004, 4
      %v1006 = vadd.f32 %v1004, %v1005
      %v1007 = vrot.slane %v1006, 2
      %v1008 = vadd.f32 %v1006, %v1007
      %v1009 = vrot.slane %v1008, 1
      %v1010 = vadd.f32 %v1008, %v1009
      %v1011 = vrcp.pop 16.0
      %v1012 = vmul.f32 %v961, %v1011
      %v1013 = vmul.f32 %v968, %v1011
      %v1014 = vmul.f32 %v975, %v1011
      %v1015 = vmul.f32 %v982, %v1011
      %v1016 = vmul.f32 %v989, %v1011
      %v1017 = vmul.f32 %v996, %v1011
      %v1018 = vmul.f32 %v1003, %v1011
      %v1019 = vmul.f32 %v1010, %v1011
      %v1020 = vsub.f32 %v924, %v1012
      %v1021 = vsub.f32 %v926, %v1012
      %v1022 = vsub.f32 %v928, %v1013
      %v1023 = vsub.f32 %v930, %v1013
      %v1024 = vsub.f32 %v932, %v1014
      %v1025 = vsub.f32 %v934, %v1014
      %v1026 = vsub.f32 %v936, %v1015
      %v1027 = vsub.f32 %v938, %v1015
      %v1028 = vsub.f32 %v940, %v1016
      %v1029 = vsub.f32 %v942, %v1016
      %v1030 = vsub.f32 %v944, %v1017
      %v1031 = vsub.f32 %v946, %v1017
      %v1032 = vsub.f32 %v948, %v1018
      %v1033 = vsub.f32 %v950, %v1018
      %v1034 = vsub.f32 %v952, %v1019
      %v1035 = vsub.f32 %v954, %v1019
      %v1036 = vmul.f32 %v1020, %v1020
      %v1037 = vmul.f32 %v1021, %v1021
      %v1038 = vmul.f32 %v1022, %v1022
      %v1039 = vmul.f32 %v1023, %v1023
      %v1040 = vmul.f32 %v1024, %v1024
      %v1041 = vmul.f32 %v1025, %v1025
      %v1042 = vmul.f32 %v1026, %v1026
      %v1043 = vmul.f32 %v1027, %v1027
      %v1044 = vmul.f32 %v1028, %v1028
      %v1045 = vmul.f32 %v1029, %v1029
      %v1046 = vmul.f32 %v1030, %v1030
      %v1047 = vmul.f32 %v1031, %v1031
      %v1048 = vmul.f32 %v1032, %v1032
      %v1049 = vmul.f32 %v1033, %v1033
      %v1050 = vmul.f32 %v1034, %v1034
      %v1051 = vmul.f32 %v1035, %v1035
      %v1052 = vadd.f32 %v1036, %v1037
      %v1053 = vrot.slane %v1052, 4
      %v1054 = vadd.f32 %v1052, %v1053
      %v1055 = vrot.slane %v1054, 2
      %v1056 = vadd.f32 %v1054, %v1055
      %v1057 = vrot.slane %v1056, 1
      %v1058 = vadd.f32 %v1056, %v1057
      %v1059 = vadd.f32 %v1038, %v1039
      %v1060 = vrot.slane %v1059, 4
      %v1061 = vadd.f32 %v1059, %v1060
      %v1062 = vrot.slane %v1061, 2
      %v1063 = vadd.f32 %v1061, %v1062
      %v1064 = vrot.slane %v1063, 1
      %v1065 = vadd.f32 %v1063, %v1064
      %v1066 = vadd.f32 %v1040, %v1041
      %v1067 = vrot.slane %v1066, 4
      %v1068 = vadd.f32 %v1066, %v1067
      %v1069 = vrot.slane %v1068, 2
      %v1070 = vadd.f32 %v1068, %v1069
      %v1071 = vrot.slane %v1070, 1
      %v1072 = vadd.f32 %v1070, %v1071
      %v1073 = vadd.f32 %v1042, %v1043
      %v1074 = vrot.slane %v1073, 4
      %v1075 = vadd.f32 %v1073, %v1074
      %v1076 = vrot.slane %v1075, 2
      %v1077 = vadd.f32 %v1075, %v1076
      %v1078 = vrot.slane %v1077, 1
      %v1079 = vadd.f32 %v1077, %v1078
      %v1080 = vadd.f32 %v1044, %v1045
      %v1081 = vrot.slane %v1080, 4
      %v1082 = vadd.f32 %v1080, %v1081
      %v1083 = vrot.slane %v1082, 2
      %v1084 = vadd.f32 %v1082, %v1083
      %v1085 = vrot.slane %v1084, 1
      %v1086 = vadd.f32 %v1084, %v1085
      %v1087 = vadd.f32 %v1046, %v1047
      %v1088 = vrot.slane %v1087, 4
      %v1089 = vadd.f32 %v1087, %v1088
      %v1090 = vrot.slane %v1089, 2
      %v1091 = vadd.f32 %v1089, %v1090
      %v1092 = vrot.slane %v1091, 1
      %v1093 = vadd.f32 %v1091, %v1092
      %v1094 = vadd.f32 %v1048, %v1049
      %v1095 = vrot.slane %v1094, 4
      %v1096 = vadd.f32 %v1094, %v1095
      %v1097 = vrot.slane %v1096, 2
      %v1098 = vadd.f32 %v1096, %v1097
      %v1099 = vrot.slane %v1098, 1
      %v1100 = vadd.f32 %v1098, %v1099
      %v1101 = vadd.f32 %v1050, %v1051
      %v1102 = vrot.slane %v1101, 4
      %v1103 = vadd.f32 %v1101, %v1102
      %v1104 = vrot.slane %v1103, 2
      %v1105 = vadd.f32 %v1103, %v1104
      %v1106 = vrot.slane %v1105, 1
      %v1107 = vadd.f32 %v1105, %v1106
      %v1108 = vrcp.pop 15.0
      %v1109 = vmul.f32 %v1058, %v1108
      %v1110 = vmul.f32 %v1065, %v1108
      %v1111 = vmul.f32 %v1072, %v1108
      %v1112 = vmul.f32 %v1079, %v1108
      %v1113 = vmul.f32 %v1086, %v1108
      %v1114 = vmul.f32 %v1093, %v1108
      %v1115 = vmul.f32 %v1100, %v1108
      %v1116 = vmul.f32 %v1107, %v1108
      %v1117 = vrsqrt.pop %v1109
      %v1118 = vmul.f32 %v1109, %v1117
      %vm1119 = vcmp.eq.f32.partialorder %v1109, inf
      %v1120 = vsel %vm1119, %v1109, %v1118
      %vm1121 = vcmp.eq.f32.partialorder %v1109, 0.0
      %v1122 = vand.u32 %v1109, 2147483648
      %v1123 = vsel %vm1121, %v1122, %v1120
      %v1124 = vrsqrt.pop %v1110
      %v1125 = vmul.f32 %v1110, %v1124
      %vm1126 = vcmp.eq.f32.partialorder %v1110, inf
      %v1127 = vsel %vm1126, %v1110, %v1125
      %vm1128 = vcmp.eq.f32.partialorder %v1110, 0.0
      %v1129 = vand.u32 %v1110, 2147483648
      %v1130 = vsel %vm1128, %v1129, %v1127
      %v1131 = vrsqrt.pop %v1111
      %v1132 = vmul.f32 %v1111, %v1131
      %vm1133 = vcmp.eq.f32.partialorder %v1111, inf
      %v1134 = vsel %vm1133, %v1111, %v1132
      %vm1135 = vcmp.eq.f32.partialorder %v1111, 0.0
      %v1136 = vand.u32 %v1111, 2147483648
      %v1137 = vsel %vm1135, %v1136, %v1134
      %v1138 = vrsqrt.pop %v1112
      %v1139 = vmul.f32 %v1112, %v1138
      %vm1140 = vcmp.eq.f32.partialorder %v1112, inf
      %v1141 = vsel %vm1140, %v1112, %v1139
      %vm1142 = vcmp.eq.f32.partialorder %v1112, 0.0
      %v1143 = vand.u32 %v1112, 2147483648
      %v1144 = vsel %vm1142, %v1143, %v1141
      %v1145 = vrsqrt.pop %v1113
      %v1146 = vmul.f32 %v1113, %v1145
      %vm1147 = vcmp.eq.f32.partialorder %v1113, inf
      %v1148 = vsel %vm1147, %v1113, %v1146
      %vm1149 = vcmp.eq.f32.partialorder %v1113, 0.0
      %v1150 = vand.u32 %v1113, 2147483648
      %v1151 = vsel %vm1149, %v1150, %v1148
      %v1152 = vrsqrt.pop %v1114
      %v1153 = vmul.f32 %v1114, %v1152
      %vm1154 = vcmp.eq.f32.partialorder %v1114, inf
      %v1155 = vsel %vm1154, %v1114, %v1153
      %vm1156 = vcmp.eq.f32.partialorder %v1114, 0.0
      %v1157 = vand.u32 %v1114, 2147483648
      %v1158 = vsel %vm1156, %v1157, %v1155
      %v1159 = vrsqrt.pop %v1115
      %v1160 = vmul.f32 %v1115, %v1159
      %vm1161 = vcmp.eq.f32.partialorder %v1115, inf
      %v1162 = vsel %vm1161, %v1115, %v1160
      %vm1163 = vcmp.eq.f32.partialorder %v1115, 0.0
      %v1164 = vand.u32 %v1115, 2147483648
      %v1165 = vsel %vm1163, %v1164, %v1162
      %v1166 = vrsqrt.pop %v1116
      %v1167 = vmul.f32 %v1116, %v1166
      %vm1168 = vcmp.eq.f32.partialorder %v1116, inf
      %v1169 = vsel %vm1168, %v1116, %v1167
      %vm1170 = vcmp.eq.f32.partialorder %v1116, 0.0
      %v1171 = vand.u32 %v1116, 2147483648
      %v1172 = vsel %vm1170, %v1171, %v1169
      %v1173 = vadd.f32 %v1123, 1e-05
      %v1174 = vadd.f32 %v1130, 1e-05
      %v1175 = vadd.f32 %v1137, 1e-05
      %v1176 = vadd.f32 %v1144, 1e-05
      %v1177 = vadd.f32 %v1151, 1e-05
      %v1178 = vadd.f32 %v1158, 1e-05
      %v1179 = vadd.f32 %v1165, 1e-05
      %v1180 = vadd.f32 %v1172, 1e-05
      %v1181 = vrcp.pop %v1173
      %v1182 = vmul.f32 %v1020, %v1181
      %v1183 = vmul.f32 %v1021, %v1181
      %v1184 = vrcp.pop %v1174
      %v1185 = vmul.f32 %v1022, %v1184
      %v1186 = vmul.f32 %v1023, %v1184
      %v1187 = vrcp.pop %v1175
      %v1188 = vmul.f32 %v1024, %v1187
      %v1189 = vmul.f32 %v1025, %v1187
      %v1190 = vrcp.pop %v1176
      %v1191 = vmul.f32 %v1026, %v1190
      %v1192 = vmul.f32 %v1027, %v1190
      %v1193 = vrcp.pop %v1177
      %v1194 = vmul.f32 %v1028, %v1193
      %v1195 = vmul.f32 %v1029, %v1193
      %v1196 = vrcp.pop %v1178
      %v1197 = vmul.f32 %v1030, %v1196
      %v1198 = vmul.f32 %v1031, %v1196
      %v1199 = vrcp.pop %v1179
      %v1200 = vmul.f32 %v1032, %v1199
      %v1201 = vmul.f32 %v1033, %v1199
      %v1202 = vrcp.pop %v1180
      %v1203 = vmul.f32 %v1034, %v1202
      %v1204 = vmul.f32 %v1035, %v1202
      %v1205 = vpack.c.bf16 %v1183, %v1182
      %v1206 = vpack.c.bf16 %v1186, %v1185
      %v1207 = vpack.c.bf16 %v1189, %v1188
      %v1208 = vpack.c.bf16 %v1192, %v1191
      %v1209 = vpack.c.bf16 %v1195, %v1194
      %v1210 = vpack.c.bf16 %v1198, %v1197
      %v1211 = vpack.c.bf16 %v1201, %v1200
      %v1212 = vpack.c.bf16 %v1204, %v1203
      %v1214 = vshrl.u32 %v1205, 16
      %v1216 = vrot.slane %v1214, 7
      %v1217 = vshll.u32 %v1205, 16
      %v1219 = vor.u32 %v1216, %v1217
      %v1221 = vshrl.u32 %v1206, 16
      %v1223 = vrot.slane %v1221, 7
      %v1224 = vshll.u32 %v1206, 16
      %v1226 = vor.u32 %v1223, %v1224
      %v1228 = vshrl.u32 %v1207, 16
      %v1230 = vrot.slane %v1228, 7
      %v1231 = vshll.u32 %v1207, 16
      %v1233 = vor.u32 %v1230, %v1231
      %v1235 = vshrl.u32 %v1208, 16
      %v1237 = vrot.slane %v1235, 7
      %v1238 = vshll.u32 %v1208, 16
      %v1240 = vor.u32 %v1237, %v1238
      %v1242 = vshrl.u32 %v1209, 16
      %v1244 = vrot.slane %v1242, 7
      %v1245 = vshll.u32 %v1209, 16
      %v1247 = vor.u32 %v1244, %v1245
      %v1249 = vshrl.u32 %v1210, 16
      %v1251 = vrot.slane %v1249, 7
      %v1252 = vshll.u32 %v1210, 16
      %v1254 = vor.u32 %v1251, %v1252
      %v1256 = vshrl.u32 %v1211, 16
      %v1258 = vrot.slane %v1256, 7
      %v1259 = vshll.u32 %v1211, 16
      %v1261 = vor.u32 %v1258, %v1259
      %v1263 = vshrl.u32 %v1212, 16
      %v1265 = vrot.slane %v1263, 7
      %v1266 = vshll.u32 %v1212, 16
      %v1268 = vor.u32 %v1265, %v1266
      %vm1277 = vcmask 1040384
      %vm1278 = vsmask.f32 256
      %vm1279 = vmand %vm1277, %vm1278
      %v1280 = vsel %vm1279, 0, %v1219
      %v1281 = vsel %vm1279, 0, %v1226
      %v1282 = vsel %vm1279, 0, %v1233
      %v1283 = vsel %vm1279, 0, %v1240
      %v1284 = vsel %vm1279, 0, %v1247
      %v1285 = vsel %vm1279, 0, %v1254
      %v1286 = vsel %vm1279, 0, %v1261
      %v1287 = vsel %vm1279, 0, %v1268
      %v1288 = vrot.slane %v1217, 1
      %v1289 = vor.u32 %v1214, %v1288
      %v1290 = vrot.slane %v1224, 1
      %v1291 = vor.u32 %v1221, %v1290
      %v1292 = vrot.slane %v1231, 1
      %v1293 = vor.u32 %v1228, %v1292
      %v1294 = vrot.slane %v1238, 1
      %v1295 = vor.u32 %v1235, %v1294
      %v1296 = vrot.slane %v1245, 1
      %v1297 = vor.u32 %v1242, %v1296
      %v1298 = vrot.slane %v1252, 1
      %v1299 = vor.u32 %v1249, %v1298
      %v1300 = vrot.slane %v1259, 1
      %v1301 = vor.u32 %v1256, %v1300
      %v1302 = vrot.slane %v1266, 1
      %v1303 = vor.u32 %v1263, %v1302
      %vm1312 = vcmask 1047552
      %vm1313 = vsmask.f32 7424
      %vm1314 = vmand %vm1312, %vm1313
      %v1315 = vsel %vm1314, %v1289, 0
      %v1316 = vsel %vm1314, %v1291, 0
      %v1317 = vsel %vm1314, %v1293, 0
      %v1318 = vsel %vm1314, %v1295, 0
      %v1319 = vsel %vm1314, %v1297, 0
      %v1320 = vsel %vm1314, %v1299, 0
      %v1321 = vsel %vm1314, %v1301, 0
      %v1322 = vsel %vm1314, %v1303, 0
      %v1323 = vld [vmem:[%s3] sm:$0xf]
      %v1324 = vld [vmem:[%s3 + $0x4] sm:$0xf]
      %v1325 = vld [vmem:[%s3 + $0x8] sm:$0xf]
      %v1326 = vld [vmem:[%s3 + $0xc] sm:$0xf]
      %v1327 = vld [vmem:[%s3 + $0x10] sm:$0xf]
      %v1328 = vld [vmem:[%s3 + $0x14] sm:$0xf]
      %v1329 = vld [vmem:[%s3 + $0x18] sm:$0xf]
      %v1330 = vld [vmem:[%s3 + $0x1c] sm:$0xf]
      %v1331 = vld [vmem:[%s3 + $0x20] sm:$0xf]
      %v1332 = vld [vmem:[%s3 + $0x24] sm:$0xf]
      %v1333 = vld [vmem:[%s3 + $0x28] sm:$0xf]
      %v1334 = vld [vmem:[%s3 + $0x2c] sm:$0xf]
      %v1335 = vld [vmem:[%s3 + $0x30] sm:$0xf]
      %v1336 = vld [vmem:[%s3 + $0x34] sm:$0xf]
      %v1337 = vld [vmem:[%s3 + $0x38] sm:$0xf]
      %v1338 = vld [vmem:[%s3 + $0x3c] sm:$0xf]
      %v1339 = vld [vmem:[%s3 + $0x40] sm:$0xf]
      %v1340 = vld [vmem:[%s3 + $0x44] sm:$0xf]
      %v1341 = vld [vmem:[%s3 + $0x48] sm:$0xf]
      %v1342 = vld [vmem:[%s3 + $0x4c] sm:$0xf]
      %v1343 = vld [vmem:[%s3 + $0x50] sm:$0xf]
      %v1344 = vld [vmem:[%s3 + $0x54] sm:$0xf]
      %v1345 = vld [vmem:[%s3 + $0x58] sm:$0xf]
      %v1346 = vld [vmem:[%s3 + $0x5c] sm:$0xf]
      %v1347 = vld [vmem:[%s3 + $0x60] sm:$0xf]
      %v1348 = vld [vmem:[%s3 + $0x64] sm:$0xf]
      %v1349 = vld [vmem:[%s3 + $0x68] sm:$0xf]
      %v1350 = vld [vmem:[%s3 + $0x6c] sm:$0xf]
      %v1351 = vld [vmem:[%s3 + $0x70] sm:$0xf]
      %v1352 = vld [vmem:[%s3 + $0x74] sm:$0xf]
      %v1353 = vld [vmem:[%s3 + $0x78] sm:$0xf]
      %v1354 = vld [vmem:[%s3 + $0x7c] sm:$0xf]
      %v1355 = vld [vmem:[%s3 + $0x80] sm:$0xf]
      %v1356 = vld [vmem:[%s3 + $0x84] sm:$0xf]
      %v1357 = vld [vmem:[%s3 + $0x88] sm:$0xf]
      %v1358 = vld [vmem:[%s3 + $0x8c] sm:$0xf]
      %v1359 = vld [vmem:[%s3 + $0x90] sm:$0xf]
      %v1360 = vld [vmem:[%s3 + $0x94] sm:$0xf]
      %v1361 = vld [vmem:[%s3 + $0x98] sm:$0xf]
      %v1362 = vld [vmem:[%s3 + $0x9c] sm:$0xf]
      %v1363 = vld [vmem:[%s3 + $0xa0] sm:$0xf]
      %v1364 = vld [vmem:[%s3 + $0xa4] sm:$0xf]
      %v1365 = vld [vmem:[%s3 + $0xa8] sm:$0xf]
      %v1366 = vld [vmem:[%s3 + $0xac] sm:$0xf]
      %v1367 = vld [vmem:[%s3 + $0xb0] sm:$0xf]
      %v1368 = vld [vmem:[%s3 + $0xb4] sm:$0xf]
      %v1369 = vld [vmem:[%s3 + $0xb8] sm:$0xf]
      %v1370 = vld [vmem:[%s3 + $0xbc] sm:$0xf]
      %v1419 = vunpack.c.l.b16 %v1323
      %v1420 = vunpack.c.l.b16 %v1324
      %v1421 = vunpack.c.l.b16 %v1325
      %v1422 = vunpack.c.l.b16 %v1326
      %v1423 = vunpack.c.l.b16 %v1327
      %v1424 = vunpack.c.l.b16 %v1328
      %v1425 = vunpack.c.l.b16 %v1329
      %v1426 = vunpack.c.l.b16 %v1330
      %v1427 = vunpack.c.l.b16 %v1331
      %v1428 = vunpack.c.l.b16 %v1332
      %v1429 = vunpack.c.l.b16 %v1333
      %v1430 = vunpack.c.l.b16 %v1334
      %v1431 = vunpack.c.l.b16 %v1335
      %v1432 = vunpack.c.l.b16 %v1336
      %v1433 = vunpack.c.l.b16 %v1337
      %v1434 = vunpack.c.l.b16 %v1338
      %v1435 = vunpack.c.l.b16 %v1339
      %v1436 = vunpack.c.l.b16 %v1340
      %v1437 = vunpack.c.l.b16 %v1341
      %v1438 = vunpack.c.l.b16 %v1342
      %v1439 = vunpack.c.l.b16 %v1343
      %v1440 = vunpack.c.l.b16 %v1344
      %v1441 = vunpack.c.l.b16 %v1345
      %v1442 = vunpack.c.l.b16 %v1346
      %v1443 = vunpack.c.l.b16 %v1347
      %v1444 = vunpack.c.l.b16 %v1348
      %v1445 = vunpack.c.l.b16 %v1349
      %v1446 = vunpack.c.l.b16 %v1350
      %v1447 = vunpack.c.l.b16 %v1351
      %v1448 = vunpack.c.l.b16 %v1352
      %v1449 = vunpack.c.l.b16 %v1353
      %v1450 = vunpack.c.l.b16 %v1354
      %v1451 = vunpack.c.l.b16 %v1355
      %v1452 = vunpack.c.l.b16 %v1356
      %v1453 = vunpack.c.l.b16 %v1357
      %v1454 = vunpack.c.l.b16 %v1358
      %v1455 = vunpack.c.l.b16 %v1359
      %v1456 = vunpack.c.l.b16 %v1360
      %v1457 = vunpack.c.l.b16 %v1361
      %v1458 = vunpack.c.l.b16 %v1362
      %v1459 = vunpack.c.l.b16 %v1363
      %v1460 = vunpack.c.l.b16 %v1364
      %v1461 = vunpack.c.l.b16 %v1365
      %v1462 = vunpack.c.l.b16 %v1366
      %v1463 = vunpack.c.l.b16 %v1367
      %v1464 = vunpack.c.l.b16 %v1368
      %v1465 = vunpack.c.l.b16 %v1369
      %v1466 = vunpack.c.l.b16 %v1370
      %v1467 = vpack.c.b16 %v1420, %v1419
      %v1468 = vpack.c.b16 %v1422, %v1421
      %v1469 = vpack.c.b16 %v1424, %v1423
      %v1470 = vpack.c.b16 %v1426, %v1425
      %v1471 = vpack.c.b16 %v1428, %v1427
      %v1472 = vpack.c.b16 %v1430, %v1429
      %v1473 = vpack.c.b16 %v1432, %v1431
      %v1474 = vpack.c.b16 %v1434, %v1433
      %v1475 = vpack.c.b16 %v1436, %v1435
      %v1476 = vpack.c.b16 %v1438, %v1437
      %v1477 = vpack.c.b16 %v1440, %v1439
      %v1478 = vpack.c.b16 %v1442, %v1441
      %v1479 = vpack.c.b16 %v1444, %v1443
      %v1480 = vpack.c.b16 %v1446, %v1445
      %v1481 = vpack.c.b16 %v1448, %v1447
      %v1482 = vpack.c.b16 %v1450, %v1449
      %v1483 = vpack.c.b16 %v1452, %v1451
      %v1484 = vpack.c.b16 %v1454, %v1453
      %v1485 = vpack.c.b16 %v1456, %v1455
      %v1486 = vpack.c.b16 %v1458, %v1457
      %v1487 = vpack.c.b16 %v1460, %v1459
      %v1488 = vpack.c.b16 %v1462, %v1461
      %v1489 = vpack.c.b16 %v1464, %v1463
      %v1490 = vpack.c.b16 %v1466, %v1465
      %1515 = vmatprep.subr.bf16.mxu0 0
      %1516 = vmatpush1.bf16.msra.mxu0 %v1474
      %1517 = vmatprep.subr.bf16.mxu0 0
      %1518 = vmatpush1.bf16.msra.mxu0 %v1473
      %1519 = vmatprep.subr.bf16.mxu0 0
      %1520 = vmatpush1.bf16.msra.mxu0 %v1472
      %1521 = vmatprep.subr.bf16.mxu0 0
      %1522 = vmatpush1.bf16.msra.mxu0 %v1471
      %1523 = vmatprep.subr.bf16.mxu0 0
      %1524 = vmatpush1.bf16.msra.mxu0 %v1470
      %1525 = vmatprep.subr.bf16.mxu0 0
      %1526 = vmatpush1.bf16.msra.mxu0 %v1469
      %1527 = vmatprep.subr.bf16.mxu0 0
      %1528 = vmatpush1.bf16.msra.mxu0 %v1468
      %1529 = vmatprep.subr.bf16.mxu0 0
      %1530 = vmatpush1.bf16.msra.mxu0 %v1467
      %1531 = vmatprep.subr.bf16.mxu0 0
      %1532 = vmatpush2.bf16.msra.mxu0 %v1482
      %1533 = vmatprep.subr.bf16.mxu0 0
      %1534 = vmatpush2.bf16.msra.mxu0 %v1481
      %1535 = vmatprep.subr.bf16.mxu0 0
      %1536 = vmatpush2.bf16.msra.mxu0 %v1480
      %1537 = vmatprep.subr.bf16.mxu0 0
      %1538 = vmatpush2.bf16.msra.mxu0 %v1479
      %1539 = vmatprep.subr.bf16.mxu0 0
      %1540 = vmatpush2.bf16.msra.mxu0 %v1478
      %1541 = vmatprep.subr.bf16.mxu0 0
      %1542 = vmatpush2.bf16.msra.mxu0 %v1477
      %1543 = vmatprep.subr.bf16.mxu0 0
      %1544 = vmatpush2.bf16.msra.mxu0 %v1476
      %1545 = vmatprep.subr.bf16.mxu0 0
      %1546 = vmatpush2.bf16.msra.mxu0 %v1475
      %1547 = vmatprep.mubr.bf16.mxu0 %v1205
      %1548 = vmatmul.mubr.bf16.gmra.mxu0 %v1280
      %v1549 = vpop.f32.mrf.mxu0
      %v1550 = vadd.f32 0.0, %v1549
      %v1551 = vpop.f32.mrf.mxu0
      %v1552 = vpop.f32.mrf.mxu0
      %v1553 = vadd.f32 0.0, %v1552
      %v1554 = vpop.f32.mrf.mxu0
      %1555 = vmatprep.mubr.bf16.mxu0 %v1206
      %1556 = vmatmul.mubr.bf16.gmra.mxu0 %v1281
      %v1557 = vpop.f32.mrf.mxu0
      %v1558 = vadd.f32 0.0, %v1557
      %v1559 = vpop.f32.mrf.mxu0
      %v1560 = vpop.f32.mrf.mxu0
      %v1561 = vadd.f32 0.0, %v1560
      %v1562 = vpop.f32.mrf.mxu0
      %1563 = vmatprep.mubr.bf16.mxu0 %v1207
      %1564 = vmatmul.mubr.bf16.gmra.mxu0 %v1282
      %v1565 = vpop.f32.mrf.mxu0
      %v1566 = vadd.f32 0.0, %v1565
      %v1567 = vpop.f32.mrf.mxu0
      %v1568 = vpop.f32.mrf.mxu0
      %v1569 = vadd.f32 0.0, %v1568
      %v1570 = vpop.f32.mrf.mxu0
      %1571 = vmatprep.mubr.bf16.mxu0 %v1208
      %1572 = vmatmul.mubr.bf16.gmra.mxu0 %v1283
      %v1573 = vpop.f32.mrf.mxu0
      %v1574 = vadd.f32 0.0, %v1573
      %v1575 = vpop.f32.mrf.mxu0
      %v1576 = vpop.f32.mrf.mxu0
      %v1577 = vadd.f32 0.0, %v1576
      %v1578 = vpop.f32.mrf.mxu0
      %1579 = vmatprep.mubr.bf16.mxu0 %v1209
      %1580 = vmatmul.mubr.bf16.gmra.mxu0 %v1284
      %v1581 = vpop.f32.mrf.mxu0
      %v1582 = vadd.f32 0.0, %v1581
      %v1583 = vpop.f32.mrf.mxu0
      %v1584 = vpop.f32.mrf.mxu0
      %v1585 = vadd.f32 0.0, %v1584
      %v1586 = vpop.f32.mrf.mxu0
      %1587 = vmatprep.mubr.bf16.mxu0 %v1210
      %1588 = vmatmul.mubr.bf16.gmra.mxu0 %v1285
      %v1589 = vpop.f32.mrf.mxu0
      %v1590 = vadd.f32 0.0, %v1589
      %v1591 = vpop.f32.mrf.mxu0
      %v1592 = vpop.f32.mrf.mxu0
      %v1593 = vadd.f32 0.0, %v1592
      %v1594 = vpop.f32.mrf.mxu0
      %1595 = vmatprep.mubr.bf16.mxu0 %v1211
      %1596 = vmatmul.mubr.bf16.gmra.mxu0 %v1286
      %v1597 = vpop.f32.mrf.mxu0
      %v1598 = vadd.f32 0.0, %v1597
      %v1599 = vpop.f32.mrf.mxu0
      %v1600 = vpop.f32.mrf.mxu0
      %v1601 = vadd.f32 0.0, %v1600
      %v1602 = vpop.f32.mrf.mxu0
      %1603 = vmatprep.mubr.bf16.mxu0 %v1212
      %1604 = vmatmul.mubr.bf16.gmra.mxu0 %v1287
      %v1605 = vpop.f32.mrf.mxu0
      %v1606 = vadd.f32 0.0, %v1605
      %v1607 = vpop.f32.mrf.mxu0
      %v1608 = vpop.f32.mrf.mxu0
      %v1609 = vadd.f32 0.0, %v1608
      %v1610 = vpop.f32.mrf.mxu0
      %1611 = vdwg.mxu0
      %1612 = vmatprep.subr.bf16.mxu0 0
      %1613 = vmatpush1.bf16.msra.mxu0 %v1490
      %1614 = vmatprep.subr.bf16.mxu0 0
      %1615 = vmatpush1.bf16.msra.mxu0 %v1489
      %1616 = vmatprep.subr.bf16.mxu0 0
      %1617 = vmatpush1.bf16.msra.mxu0 %v1488
      %1618 = vmatprep.subr.bf16.mxu0 0
      %1619 = vmatpush1.bf16.msra.mxu0 %v1487
      %1620 = vmatprep.subr.bf16.mxu0 0
      %1621 = vmatpush1.bf16.msra.mxu0 %v1486
      %1622 = vmatprep.subr.bf16.mxu0 0
      %1623 = vmatpush1.bf16.msra.mxu0 %v1485
      %1624 = vmatprep.subr.bf16.mxu0 0
      %1625 = vmatpush1.bf16.msra.mxu0 %v1484
      %1626 = vmatprep.subr.bf16.mxu0 0
      %1627 = vmatpush1.bf16.msra.mxu0 %v1483
      %1628 = vmatprep.subr.bf16.mxu0 0
      %1629 = vmatpush2.bf16.msra.mxu0 0
      %1630 = vmatprep.subr.bf16.mxu0 0
      %1631 = vmatpush2.bf16.msra.mxu0 0
      %1632 = vmatprep.subr.bf16.mxu0 0
      %1633 = vmatpush2.bf16.msra.mxu0 0
      %1634 = vmatprep.subr.bf16.mxu0 0
      %1635 = vmatpush2.bf16.msra.mxu0 0
      %1636 = vmatprep.subr.bf16.mxu0 0
      %1637 = vmatpush2.bf16.msra.mxu0 0
      %1638 = vmatprep.subr.bf16.mxu0 0
      %1639 = vmatpush2.bf16.msra.mxu0 0
      %1640 = vmatprep.subr.bf16.mxu0 0
      %1641 = vmatpush2.bf16.msra.mxu0 0
      %1642 = vmatprep.subr.bf16.mxu0 0
      %1643 = vmatpush2.bf16.msra.mxu0 0
      %1644 = vmatprep.mubr.bf16.mxu0 0
      %1645 = vmatmul.mubr.bf16.gmra.mxu0 %v1315
      %v1646 = vpop.f32.mrf.mxu0
      %v1647 = vadd.f32 %v1550, %v1646
      %v1648 = vpop.f32.mrf.mxu0
      %v1649 = vpop.f32.mrf.mxu0
      %v1650 = vadd.f32 %v1553, %v1649
      %v1651 = vpop.f32.mrf.mxu0
      %1652 = vmatprep.mubr.bf16.mxu0 0
      %1653 = vmatmul.mubr.bf16.gmra.mxu0 %v1316
      %v1654 = vpop.f32.mrf.mxu0
      %v1655 = vadd.f32 %v1558, %v1654
      %v1656 = vpop.f32.mrf.mxu0
      %v1657 = vpop.f32.mrf.mxu0
      %v1658 = vadd.f32 %v1561, %v1657
      %v1659 = vpop.f32.mrf.mxu0
      %1660 = vmatprep.mubr.bf16.mxu0 0
      %1661 = vmatmul.mubr.bf16.gmra.mxu0 %v1317
      %v1662 = vpop.f32.mrf.mxu0
      %v1663 = vadd.f32 %v1566, %v1662
      %v1664 = vpop.f32.mrf.mxu0
      %v1665 = vpop.f32.mrf.mxu0
      %v1666 = vadd.f32 %v1569, %v1665
      %v1667 = vpop.f32.mrf.mxu0
      %1668 = vmatprep.mubr.bf16.mxu0 0
      %1669 = vmatmul.mubr.bf16.gmra.mxu0 %v1318
      %v1670 = vpop.f32.mrf.mxu0
      %v1671 = vadd.f32 %v1574, %v1670
      %v1672 = vpop.f32.mrf.mxu0
      %v1673 = vpop.f32.mrf.mxu0
      %v1674 = vadd.f32 %v1577, %v1673
      %v1675 = vpop.f32.mrf.mxu0
      %1676 = vmatprep.mubr.bf16.mxu0 0
      %1677 = vmatmul.mubr.bf16.gmra.mxu0 %v1319
      %v1678 = vpop.f32.mrf.mxu0
      %v1679 = vadd.f32 %v1582, %v1678
      %v1680 = vpop.f32.mrf.mxu0
      %v1681 = vpop.f32.mrf.mxu0
      %v1682 = vadd.f32 %v1585, %v1681
      %v1683 = vpop.f32.mrf.mxu0
      %1684 = vmatprep.mubr.bf16.mxu0 0
      %1685 = vmatmul.mubr.bf16.gmra.mxu0 %v1320
      %v1686 = vpop.f32.mrf.mxu0
      %v1687 = vadd.f32 %v1590, %v1686
      %v1688 = vpop.f32.mrf.mxu0
      %v1689 = vpop.f32.mrf.mxu0
      %v1690 = vadd.f32 %v1593, %v1689
      %v1691 = vpop.f32.mrf.mxu0
      %1692 = vmatprep.mubr.bf16.mxu0 0
      %1693 = vmatmul.mubr.bf16.gmra.mxu0 %v1321
      %v1694 = vpop.f32.mrf.mxu0
      %v1695 = vadd.f32 %v1598, %v1694
      %v1696 = vpop.f32.mrf.mxu0
      %v1697 = vpop.f32.mrf.mxu0
      %v1698 = vadd.f32 %v1601, %v1697
      %v1699 = vpop.f32.mrf.mxu0
      %1700 = vmatprep.mubr.bf16.mxu0 0
      %1701 = vmatmul.mubr.bf16.gmra.mxu0 %v1322
      %v1702 = vpop.f32.mrf.mxu0
      %v1703 = vadd.f32 %v1606, %v1702
      %v1704 = vpop.f32.mrf.mxu0
      %v1705 = vpop.f32.mrf.mxu0
      %v1706 = vadd.f32 %v1609, %v1705
      %v1707 = vpop.f32.mrf.mxu0
      %1708 = vdwg.mxu0
      %v1709 = vld [vmem:[%s4] sm:$0x1]
      %v1711 = vlaneseq
      %v1712 = vshrl.u32 %v1711, 7
      %v1713 = vsub.s32 0, %v1712
      %v1714 = vrot.slane %v1709, %v1713
      %v1716 = vadd.f32 %v1647, %v1714
      %v1717 = vadd.f32 %v1650, %v1714
      %v1718 = vadd.f32 %v1655, %v1714
      %v1719 = vadd.f32 %v1658, %v1714
      %v1720 = vadd.f32 %v1663, %v1714
      %v1721 = vadd.f32 %v1666, %v1714
      %v1722 = vadd.f32 %v1671, %v1714
      %v1723 = vadd.f32 %v1674, %v1714
      %v1724 = vadd.f32 %v1679, %v1714
      %v1725 = vadd.f32 %v1682, %v1714
      %v1726 = vadd.f32 %v1687, %v1714
      %v1727 = vadd.f32 %v1690, %v1714
      %v1728 = vadd.f32 %v1695, %v1714
      %v1729 = vadd.f32 %v1698, %v1714
      %v1730 = vadd.f32 %v1703, %v1714
      %v1731 = vadd.f32 %v1706, %v1714
      %v1732 = vmax.f32 %v1716, 0.0
      %v1733 = vmax.f32 %v1717, 0.0
      %v1734 = vmax.f32 %v1718, 0.0
      %v1735 = vmax.f32 %v1719, 0.0
      %v1736 = vmax.f32 %v1720, 0.0
      %v1737 = vmax.f32 %v1721, 0.0
      %v1738 = vmax.f32 %v1722, 0.0
      %v1739 = vmax.f32 %v1723, 0.0
      %v1740 = vmax.f32 %v1724, 0.0
      %v1741 = vmax.f32 %v1725, 0.0
      %v1742 = vmax.f32 %v1726, 0.0
      %v1743 = vmax.f32 %v1727, 0.0
      %v1744 = vmax.f32 %v1728, 0.0
      %v1745 = vmax.f32 %v1729, 0.0
      %v1746 = vmax.f32 %v1730, 0.0
      %v1747 = vmax.f32 %v1731, 0.0
      %v1748 = vpack.c.bf16 %v1733, %v1732
      %v1749 = vpack.c.bf16 %v1735, %v1734
      %v1750 = vpack.c.bf16 %v1737, %v1736
      %v1751 = vpack.c.bf16 %v1739, %v1738
      %v1752 = vpack.c.bf16 %v1741, %v1740
      %v1753 = vpack.c.bf16 %v1743, %v1742
      %v1754 = vpack.c.bf16 %v1745, %v1744
      %v1755 = vpack.c.bf16 %v1747, %v1746
      %v1757 = vshrl.u32 %v1748, 16
      %v1759 = vrot.slane %v1757, 7
      %v1760 = vshll.u32 %v1748, 16
      %v1762 = vor.u32 %v1759, %v1760
      %v1764 = vshrl.u32 %v1749, 16
      %v1766 = vrot.slane %v1764, 7
      %v1767 = vshll.u32 %v1749, 16
      %v1769 = vor.u32 %v1766, %v1767
      %v1771 = vshrl.u32 %v1750, 16
      %v1773 = vrot.slane %v1771, 7
      %v1774 = vshll.u32 %v1750, 16
      %v1776 = vor.u32 %v1773, %v1774
      %v1778 = vshrl.u32 %v1751, 16
      %v1780 = vrot.slane %v1778, 7
      %v1781 = vshll.u32 %v1751, 16
      %v1783 = vor.u32 %v1780, %v1781
      %v1785 = vshrl.u32 %v1752, 16
      %v1787 = vrot.slane %v1785, 7
      %v1788 = vshll.u32 %v1752, 16
      %v1790 = vor.u32 %v1787, %v1788
      %v1792 = vshrl.u32 %v1753, 16
      %v1794 = vrot.slane %v1792, 7
      %v1795 = vshll.u32 %v1753, 16
      %v1797 = vor.u32 %v1794, %v1795
      %v1799 = vshrl.u32 %v1754, 16
      %v1801 = vrot.slane %v1799, 7
      %v1802 = vshll.u32 %v1754, 16
      %v1804 = vor.u32 %v1801, %v1802
      %v1806 = vshrl.u32 %v1755, 16
      %v1808 = vrot.slane %v1806, 7
      %v1809 = vshll.u32 %v1755, 16
      %v1811 = vor.u32 %v1808, %v1809
      %v1820 = vsel %vm1279, 0, %v1762
      %v1821 = vsel %vm1279, 0, %v1769
      %v1822 = vsel %vm1279, 0, %v1776
      %v1823 = vsel %vm1279, 0, %v1783
      %v1824 = vsel %vm1279, 0, %v1790
      %v1825 = vsel %vm1279, 0, %v1797
      %v1826 = vsel %vm1279, 0, %v1804
      %v1827 = vsel %vm1279, 0, %v1811
      %v1828 = vrot.slane %v1760, 1
      %v1829 = vor.u32 %v1757, %v1828
      %v1830 = vrot.slane %v1767, 1
      %v1831 = vor.u32 %v1764, %v1830
      %v1832 = vrot.slane %v1774, 1
      %v1833 = vor.u32 %v1771, %v1832
      %v1834 = vrot.slane %v1781, 1
      %v1835 = vor.u32 %v1778, %v1834
      %v1836 = vrot.slane %v1788, 1
      %v1837 = vor.u32 %v1785, %v1836
      %v1838 = vrot.slane %v1795, 1
      %v1839 = vor.u32 %v1792, %v1838
      %v1840 = vrot.slane %v1802, 1
      %v1841 = vor.u32 %v1799, %v1840
      %v1842 = vrot.slane %v1809, 1
      %v1843 = vor.u32 %v1806, %v1842
      %v1852 = vsel %vm1314, %v1829, 0
      %v1853 = vsel %vm1314, %v1831, 0
      %v1854 = vsel %vm1314, %v1833, 0
      %v1855 = vsel %vm1314, %v1835, 0
      %v1856 = vsel %vm1314, %v1837, 0
      %v1857 = vsel %vm1314, %v1839, 0
      %v1858 = vsel %vm1314, %v1841, 0
      %v1859 = vsel %vm1314, %v1843, 0
      %v1860 = vld [vmem:[%s5] sm:$0xf]
      %v1861 = vld [vmem:[%s5 + $0x4] sm:$0xf]
      %v1862 = vld [vmem:[%s5 + $0x8] sm:$0xf]
      %v1863 = vld [vmem:[%s5 + $0xc] sm:$0xf]
      %v1864 = vld [vmem:[%s5 + $0x10] sm:$0xf]
      %v1865 = vld [vmem:[%s5 + $0x14] sm:$0xf]
      %v1866 = vld [vmem:[%s5 + $0x18] sm:$0xf]
      %v1867 = vld [vmem:[%s5 + $0x1c] sm:$0xf]
      %v1868 = vld [vmem:[%s5 + $0x20] sm:$0xf]
      %v1869 = vld [vmem:[%s5 + $0x24] sm:$0xf]
      %v1870 = vld [vmem:[%s5 + $0x28] sm:$0xf]
      %v1871 = vld [vmem:[%s5 + $0x2c] sm:$0xf]
      %v1872 = vld [vmem:[%s5 + $0x30] sm:$0xf]
      %v1873 = vld [vmem:[%s5 + $0x34] sm:$0xf]
      %v1874 = vld [vmem:[%s5 + $0x38] sm:$0xf]
      %v1875 = vld [vmem:[%s5 + $0x3c] sm:$0xf]
      %v1876 = vld [vmem:[%s5 + $0x40] sm:$0xf]
      %v1877 = vld [vmem:[%s5 + $0x44] sm:$0xf]
      %v1878 = vld [vmem:[%s5 + $0x48] sm:$0xf]
      %v1879 = vld [vmem:[%s5 + $0x4c] sm:$0xf]
      %v1880 = vld [vmem:[%s5 + $0x50] sm:$0xf]
      %v1881 = vld [vmem:[%s5 + $0x54] sm:$0xf]
      %v1882 = vld [vmem:[%s5 + $0x58] sm:$0xf]
      %v1883 = vld [vmem:[%s5 + $0x5c] sm:$0xf]
      %v1884 = vld [vmem:[%s5 + $0x60] sm:$0xf]
      %v1885 = vld [vmem:[%s5 + $0x64] sm:$0xf]
      %v1886 = vld [vmem:[%s5 + $0x68] sm:$0xf]
      %v1887 = vld [vmem:[%s5 + $0x6c] sm:$0xf]
      %v1888 = vld [vmem:[%s5 + $0x70] sm:$0xf]
      %v1889 = vld [vmem:[%s5 + $0x74] sm:$0xf]
      %v1890 = vld [vmem:[%s5 + $0x78] sm:$0xf]
      %v1891 = vld [vmem:[%s5 + $0x7c] sm:$0xf]
      %v1892 = vld [vmem:[%s5 + $0x80] sm:$0xf]
      %v1893 = vld [vmem:[%s5 + $0x84] sm:$0xf]
      %v1894 = vld [vmem:[%s5 + $0x88] sm:$0xf]
      %v1895 = vld [vmem:[%s5 + $0x8c] sm:$0xf]
      %v1896 = vld [vmem:[%s5 + $0x90] sm:$0xf]
      %v1897 = vld [vmem:[%s5 + $0x94] sm:$0xf]
      %v1898 = vld [vmem:[%s5 + $0x98] sm:$0xf]
      %v1899 = vld [vmem:[%s5 + $0x9c] sm:$0xf]
      %v1900 = vld [vmem:[%s5 + $0xa0] sm:$0xf]
      %v1901 = vld [vmem:[%s5 + $0xa4] sm:$0xf]
      %v1902 = vld [vmem:[%s5 + $0xa8] sm:$0xf]
      %v1903 = vld [vmem:[%s5 + $0xac] sm:$0xf]
      %v1904 = vld [vmem:[%s5 + $0xb0] sm:$0xf]
      %v1905 = vld [vmem:[%s5 + $0xb4] sm:$0xf]
      %v1906 = vld [vmem:[%s5 + $0xb8] sm:$0xf]
      %v1907 = vld [vmem:[%s5 + $0xbc] sm:$0xf]
      %v1956 = vunpack.c.l.b16 %v1860
      %v1957 = vunpack.c.l.b16 %v1861
      %v1958 = vunpack.c.l.b16 %v1862
      %v1959 = vunpack.c.l.b16 %v1863
      %v1960 = vunpack.c.l.b16 %v1864
      %v1961 = vunpack.c.l.b16 %v1865
      %v1962 = vunpack.c.l.b16 %v1866
      %v1963 = vunpack.c.l.b16 %v1867
      %v1964 = vunpack.c.l.b16 %v1868
      %v1965 = vunpack.c.l.b16 %v1869
      %v1966 = vunpack.c.l.b16 %v1870
      %v1967 = vunpack.c.l.b16 %v1871
      %v1968 = vunpack.c.l.b16 %v1872
      %v1969 = vunpack.c.l.b16 %v1873
      %v1970 = vunpack.c.l.b16 %v1874
      %v1971 = vunpack.c.l.b16 %v1875
      %v1972 = vunpack.c.l.b16 %v1876
      %v1973 = vunpack.c.l.b16 %v1877
      %v1974 = vunpack.c.l.b16 %v1878
      %v1975 = vunpack.c.l.b16 %v1879
      %v1976 = vunpack.c.l.b16 %v1880
      %v1977 = vunpack.c.l.b16 %v1881
      %v1978 = vunpack.c.l.b16 %v1882
      %v1979 = vunpack.c.l.b16 %v1883
      %v1980 = vunpack.c.l.b16 %v1884
      %v1981 = vunpack.c.l.b16 %v1885
      %v1982 = vunpack.c.l.b16 %v1886
      %v1983 = vunpack.c.l.b16 %v1887
      %v1984 = vunpack.c.l.b16 %v1888
      %v1985 = vunpack.c.l.b16 %v1889
      %v1986 = vunpack.c.l.b16 %v1890
      %v1987 = vunpack.c.l.b16 %v1891
      %v1988 = vunpack.c.l.b16 %v1892
      %v1989 = vunpack.c.l.b16 %v1893
      %v1990 = vunpack.c.l.b16 %v1894
      %v1991 = vunpack.c.l.b16 %v1895
      %v1992 = vunpack.c.l.b16 %v1896
      %v1993 = vunpack.c.l.b16 %v1897
      %v1994 = vunpack.c.l.b16 %v1898
      %v1995 = vunpack.c.l.b16 %v1899
      %v1996 = vunpack.c.l.b16 %v1900
      %v1997 = vunpack.c.l.b16 %v1901
      %v1998 = vunpack.c.l.b16 %v1902
      %v1999 = vunpack.c.l.b16 %v1903
      %v2000 = vunpack.c.l.b16 %v1904
      %v2001 = vunpack.c.l.b16 %v1905
      %v2002 = vunpack.c.l.b16 %v1906
      %v2003 = vunpack.c.l.b16 %v1907
      %v2004 = vpack.c.b16 %v1957, %v1956
      %v2005 = vpack.c.b16 %v1959, %v1958
      %v2006 = vpack.c.b16 %v1961, %v1960
      %v2007 = vpack.c.b16 %v1963, %v1962
      %v2008 = vpack.c.b16 %v1965, %v1964
      %v2009 = vpack.c.b16 %v1967, %v1966
      %v2010 = vpack.c.b16 %v1969, %v1968
      %v2011 = vpack.c.b16 %v1971, %v1970
      %v2012 = vpack.c.b16 %v1973, %v1972
      %v2013 = vpack.c.b16 %v1975, %v1974
      %v2014 = vpack.c.b16 %v1977, %v1976
      %v2015 = vpack.c.b16 %v1979, %v1978
      %v2016 = vpack.c.b16 %v1981, %v1980
      %v2017 = vpack.c.b16 %v1983, %v1982
      %v2018 = vpack.c.b16 %v1985, %v1984
      %v2019 = vpack.c.b16 %v1987, %v1986
      %v2020 = vpack.c.b16 %v1989, %v1988
      %v2021 = vpack.c.b16 %v1991, %v1990
      %v2022 = vpack.c.b16 %v1993, %v1992
      %v2023 = vpack.c.b16 %v1995, %v1994
      %v2024 = vpack.c.b16 %v1997, %v1996
      %v2025 = vpack.c.b16 %v1999, %v1998
      %v2026 = vpack.c.b16 %v2001, %v2000
      %v2027 = vpack.c.b16 %v2003, %v2002
      %2052 = vmatprep.subr.bf16.mxu0 0
      %2053 = vmatpush1.bf16.msra.mxu0 %v2011
      %2054 = vmatprep.subr.bf16.mxu0 0
      %2055 = vmatpush1.bf16.msra.mxu0 %v2010
      %2056 = vmatprep.subr.bf16.mxu0 0
      %2057 = vmatpush1.bf16.msra.mxu0 %v2009
      %2058 = vmatprep.subr.bf16.mxu0 0
      %2059 = vmatpush1.bf16.msra.mxu0 %v2008
      %2060 = vmatprep.subr.bf16.mxu0 0
      %2061 = vmatpush1.bf16.msra.mxu0 %v2007
      %2062 = vmatprep.subr.bf16.mxu0 0
      %2063 = vmatpush1.bf16.msra.mxu0 %v2006
      %2064 = vmatprep.subr.bf16.mxu0 0
      %2065 = vmatpush1.bf16.msra.mxu0 %v2005
      %2066 = vmatprep.subr.bf16.mxu0 0
      %2067 = vmatpush1.bf16.msra.mxu0 %v2004
      %2068 = vmatprep.subr.bf16.mxu0 0
      %2069 = vmatpush2.bf16.msra.mxu0 %v2019
      %2070 = vmatprep.subr.bf16.mxu0 0
      %2071 = vmatpush2.bf16.msra.mxu0 %v2018
      %2072 = vmatprep.subr.bf16.mxu0 0
      %2073 = vmatpush2.bf16.msra.mxu0 %v2017
      %2074 = vmatprep.subr.bf16.mxu0 0
      %2075 = vmatpush2.bf16.msra.mxu0 %v2016
      %2076 = vmatprep.subr.bf16.mxu0 0
      %2077 = vmatpush2.bf16.msra.mxu0 %v2015
      %2078 = vmatprep.subr.bf16.mxu0 0
      %2079 = vmatpush2.bf16.msra.mxu0 %v2014
      %2080 = vmatprep.subr.bf16.mxu0 0
      %2081 = vmatpush2.bf16.msra.mxu0 %v2013
      %2082 = vmatprep.subr.bf16.mxu0 0
      %2083 = vmatpush2.bf16.msra.mxu0 %v2012
      %2084 = vmatprep.mubr.bf16.mxu0 %v1748
      %2085 = vmatmul.mubr.bf16.gmra.mxu0 %v1820
      %v2086 = vpop.f32.mrf.mxu0
      %v2087 = vadd.f32 0.0, %v2086
      %v2088 = vpop.f32.mrf.mxu0
      %v2089 = vpop.f32.mrf.mxu0
      %v2090 = vadd.f32 0.0, %v2089
      %v2091 = vpop.f32.mrf.mxu0
      %2092 = vmatprep.mubr.bf16.mxu0 %v1749
      %2093 = vmatmul.mubr.bf16.gmra.mxu0 %v1821
      %v2094 = vpop.f32.mrf.mxu0
      %v2095 = vadd.f32 0.0, %v2094
      %v2096 = vpop.f32.mrf.mxu0
      %v2097 = vpop.f32.mrf.mxu0
      %v2098 = vadd.f32 0.0, %v2097
      %v2099 = vpop.f32.mrf.mxu0
      %2100 = vmatprep.mubr.bf16.mxu0 %v1750
      %2101 = vmatmul.mubr.bf16.gmra.mxu0 %v1822
      %v2102 = vpop.f32.mrf.mxu0
      %v2103 = vadd.f32 0.0, %v2102
      %v2104 = vpop.f32.mrf.mxu0
      %v2105 = vpop.f32.mrf.mxu0
      %v2106 = vadd.f32 0.0, %v2105
      %v2107 = vpop.f32.mrf.mxu0
      %2108 = vmatprep.mubr.bf16.mxu0 %v1751
      %2109 = vmatmul.mubr.bf16.gmra.mxu0 %v1823
      %v2110 = vpop.f32.mrf.mxu0
      %v2111 = vadd.f32 0.0, %v2110
      %v2112 = vpop.f32.mrf.mxu0
      %v2113 = vpop.f32.mrf.mxu0
      %v2114 = vadd.f32 0.0, %v2113
      %v2115 = vpop.f32.mrf.mxu0
      %2116 = vmatprep.mubr.bf16.mxu0 %v1752
      %2117 = vmatmul.mubr.bf16.gmra.mxu0 %v1824
      %v2118 = vpop.f32.mrf.mxu0
      %v2119 = vadd.f32 0.0, %v2118
      %v2120 = vpop.f32.mrf.mxu0
      %v2121 = vpop.f32.mrf.mxu0
      %v2122 = vadd.f32 0.0, %v2121
      %v2123 = vpop.f32.mrf.mxu0
      %2124 = vmatprep.mubr.bf16.mxu0 %v1753
      %2125 = vmatmul.mubr.bf16.gmra.mxu0 %v1825
      %v2126 = vpop.f32.mrf.mxu0
      %v2127 = vadd.f32 0.0, %v2126
      %v2128 = vpop.f32.mrf.mxu0
      %v2129 = vpop.f32.mrf.mxu0
      %v2130 = vadd.f32 0.0, %v2129
      %v2131 = vpop.f32.mrf.mxu0
      %2132 = vmatprep.mubr.bf16.mxu0 %v1754
      %2133 = vmatmul.mubr.bf16.gmra.mxu0 %v1826
      %v2134 = vpop.f32.mrf.mxu0
      %v2135 = vadd.f32 0.0, %v2134
      %v2136 = vpop.f32.mrf.mxu0
      %v2137 = vpop.f32.mrf.mxu0
      %v2138 = vadd.f32 0.0, %v2137
      %v2139 = vpop.f32.mrf.mxu0
      %2140 = vmatprep.mubr.bf16.mxu0 %v1755
      %2141 = vmatmul.mubr.bf16.gmra.mxu0 %v1827
      %v2142 = vpop.f32.mrf.mxu0
      %v2143 = vadd.f32 0.0, %v2142
      %v2144 = vpop.f32.mrf.mxu0
      %v2145 = vpop.f32.mrf.mxu0
      %v2146 = vadd.f32 0.0, %v2145
      %v2147 = vpop.f32.mrf.mxu0
      %2148 = vdwg.mxu0
      %2149 = vmatprep.subr.bf16.mxu0 0
      %2150 = vmatpush1.bf16.msra.mxu0 %v2027
      %2151 = vmatprep.subr.bf16.mxu0 0
      %2152 = vmatpush1.bf16.msra.mxu0 %v2026
      %2153 = vmatprep.subr.bf16.mxu0 0
      %2154 = vmatpush1.bf16.msra.mxu0 %v2025
      %2155 = vmatprep.subr.bf16.mxu0 0
      %2156 = vmatpush1.bf16.msra.mxu0 %v2024
      %2157 = vmatprep.subr.bf16.mxu0 0
      %2158 = vmatpush1.bf16.msra.mxu0 %v2023
      %2159 = vmatprep.subr.bf16.mxu0 0
      %2160 = vmatpush1.bf16.msra.mxu0 %v2022
      %2161 = vmatprep.subr.bf16.mxu0 0
      %2162 = vmatpush1.bf16.msra.mxu0 %v2021
      %2163 = vmatprep.subr.bf16.mxu0 0
      %2164 = vmatpush1.bf16.msra.mxu0 %v2020
      %2165 = vmatprep.subr.bf16.mxu0 0
      %2166 = vmatpush2.bf16.msra.mxu0 0
      %2167 = vmatprep.subr.bf16.mxu0 0
      %2168 = vmatpush2.bf16.msra.mxu0 0
      %2169 = vmatprep.subr.bf16.mxu0 0
      %2170 = vmatpush2.bf16.msra.mxu0 0
      %2171 = vmatprep.subr.bf16.mxu0 0
      %2172 = vmatpush2.bf16.msra.mxu0 0
      %2173 = vmatprep.subr.bf16.mxu0 0
      %2174 = vmatpush2.bf16.msra.mxu0 0
      %2175 = vmatprep.subr.bf16.mxu0 0
      %2176 = vmatpush2.bf16.msra.mxu0 0
      %2177 = vmatprep.subr.bf16.mxu0 0
      %2178 = vmatpush2.bf16.msra.mxu0 0
      %2179 = vmatprep.subr.bf16.mxu0 0
      %2180 = vmatpush2.bf16.msra.mxu0 0
      %2181 = vmatprep.mubr.bf16.mxu0 0
      %2182 = vmatmul.mubr.bf16.gmra.mxu0 %v1852
      %v2183 = vpop.f32.mrf.mxu0
      %v2184 = vadd.f32 %v2087, %v2183
      %v2185 = vpop.f32.mrf.mxu0
      %v2186 = vpop.f32.mrf.mxu0
      %v2187 = vadd.f32 %v2090, %v2186
      %v2188 = vpop.f32.mrf.mxu0
      %2189 = vmatprep.mubr.bf16.mxu0 0
      %2190 = vmatmul.mubr.bf16.gmra.mxu0 %v1853
      %v2191 = vpop.f32.mrf.mxu0
      %v2192 = vadd.f32 %v2095, %v2191
      %v2193 = vpop.f32.mrf.mxu0
      %v2194 = vpop.f32.mrf.mxu0
      %v2195 = vadd.f32 %v2098, %v2194
      %v2196 = vpop.f32.mrf.mxu0
      %2197 = vmatprep.mubr.bf16.mxu0 0
      %2198 = vmatmul.mubr.bf16.gmra.mxu0 %v1854
      %v2199 = vpop.f32.mrf.mxu0
      %v2200 = vadd.f32 %v2103, %v2199
      %v2201 = vpop.f32.mrf.mxu0
      %v2202 = vpop.f32.mrf.mxu0
      %v2203 = vadd.f32 %v2106, %v2202
      %v2204 = vpop.f32.mrf.mxu0
      %2205 = vmatprep.mubr.bf16.mxu0 0
      %2206 = vmatmul.mubr.bf16.gmra.mxu0 %v1855
      %v2207 = vpop.f32.mrf.mxu0
      %v2208 = vadd.f32 %v2111, %v2207
      %v2209 = vpop.f32.mrf.mxu0
      %v2210 = vpop.f32.mrf.mxu0
      %v2211 = vadd.f32 %v2114, %v2210
      %v2212 = vpop.f32.mrf.mxu0
      %2213 = vmatprep.mubr.bf16.mxu0 0
      %2214 = vmatmul.mubr.bf16.gmra.mxu0 %v1856
      %v2215 = vpop.f32.mrf.mxu0
      %v2216 = vadd.f32 %v2119, %v2215
      %v2217 = vpop.f32.mrf.mxu0
      %v2218 = vpop.f32.mrf.mxu0
      %v2219 = vadd.f32 %v2122, %v2218
      %v2220 = vpop.f32.mrf.mxu0
      %2221 = vmatprep.mubr.bf16.mxu0 0
      %2222 = vmatmul.mubr.bf16.gmra.mxu0 %v1857
      %v2223 = vpop.f32.mrf.mxu0
      %v2224 = vadd.f32 %v2127, %v2223
      %v2225 = vpop.f32.mrf.mxu0
      %v2226 = vpop.f32.mrf.mxu0
      %v2227 = vadd.f32 %v2130, %v2226
      %v2228 = vpop.f32.mrf.mxu0
      %2229 = vmatprep.mubr.bf16.mxu0 0
      %2230 = vmatmul.mubr.bf16.gmra.mxu0 %v1858
      %v2231 = vpop.f32.mrf.mxu0
      %v2232 = vadd.f32 %v2135, %v2231
      %v2233 = vpop.f32.mrf.mxu0
      %v2234 = vpop.f32.mrf.mxu0
      %v2235 = vadd.f32 %v2138, %v2234
      %v2236 = vpop.f32.mrf.mxu0
      %2237 = vmatprep.mubr.bf16.mxu0 0
      %2238 = vmatmul.mubr.bf16.gmra.mxu0 %v1859
      %v2239 = vpop.f32.mrf.mxu0
      %v2240 = vadd.f32 %v2143, %v2239
      %v2241 = vpop.f32.mrf.mxu0
      %v2242 = vpop.f32.mrf.mxu0
      %v2243 = vadd.f32 %v2146, %v2242
      %v2244 = vpop.f32.mrf.mxu0
      %2245 = vdwg.mxu0
      %v2246 = vld [vmem:[%s6] sm:$0x1]
      %v2248 = vlaneseq
      %v2249 = vshrl.u32 %v2248, 7
      %v2250 = vsub.s32 0, %v2249
      %v2251 = vrot.slane %v2246, %v2250
      %v2253 = vadd.f32 %v2184, %v2251
      %v2254 = vadd.f32 %v2187, %v2251
      %v2255 = vadd.f32 %v2192, %v2251
      %v2256 = vadd.f32 %v2195, %v2251
      %v2257 = vadd.f32 %v2200, %v2251
      %v2258 = vadd.f32 %v2203, %v2251
      %v2259 = vadd.f32 %v2208, %v2251
      %v2260 = vadd.f32 %v2211, %v2251
      %v2261 = vadd.f32 %v2216, %v2251
      %v2262 = vadd.f32 %v2219, %v2251
      %v2263 = vadd.f32 %v2224, %v2251
      %v2264 = vadd.f32 %v2227, %v2251
      %v2265 = vadd.f32 %v2232, %v2251
      %v2266 = vadd.f32 %v2235, %v2251
      %v2267 = vadd.f32 %v2240, %v2251
      %v2268 = vadd.f32 %v2243, %v2251
      %v2269 = vmax.f32 %v2253, 0.0
      %v2270 = vmax.f32 %v2254, 0.0
      %v2271 = vmax.f32 %v2255, 0.0
      %v2272 = vmax.f32 %v2256, 0.0
      %v2273 = vmax.f32 %v2257, 0.0
      %v2274 = vmax.f32 %v2258, 0.0
      %v2275 = vmax.f32 %v2259, 0.0
      %v2276 = vmax.f32 %v2260, 0.0
      %v2277 = vmax.f32 %v2261, 0.0
      %v2278 = vmax.f32 %v2262, 0.0
      %v2279 = vmax.f32 %v2263, 0.0
      %v2280 = vmax.f32 %v2264, 0.0
      %v2281 = vmax.f32 %v2265, 0.0
      %v2282 = vmax.f32 %v2266, 0.0
      %v2283 = vmax.f32 %v2267, 0.0
      %v2284 = vmax.f32 %v2268, 0.0
      %v2285 = vadd.f32 %v2269, %v2270
      %v2286 = vrot.slane %v2285, 4
      %v2287 = vadd.f32 %v2285, %v2286
      %v2288 = vrot.slane %v2287, 2
      %v2289 = vadd.f32 %v2287, %v2288
      %v2290 = vrot.slane %v2289, 1
      %v2291 = vadd.f32 %v2289, %v2290
      %v2292 = vadd.f32 %v2271, %v2272
      %v2293 = vrot.slane %v2292, 4
      %v2294 = vadd.f32 %v2292, %v2293
      %v2295 = vrot.slane %v2294, 2
      %v2296 = vadd.f32 %v2294, %v2295
      %v2297 = vrot.slane %v2296, 1
      %v2298 = vadd.f32 %v2296, %v2297
      %v2299 = vadd.f32 %v2273, %v2274
      %v2300 = vrot.slane %v2299, 4
      %v2301 = vadd.f32 %v2299, %v2300
      %v2302 = vrot.slane %v2301, 2
      %v2303 = vadd.f32 %v2301, %v2302
      %v2304 = vrot.slane %v2303, 1
      %v2305 = vadd.f32 %v2303, %v2304
      %v2306 = vadd.f32 %v2275, %v2276
      %v2307 = vrot.slane %v2306, 4
      %v2308 = vadd.f32 %v2306, %v2307
      %v2309 = vrot.slane %v2308, 2
      %v2310 = vadd.f32 %v2308, %v2309
      %v2311 = vrot.slane %v2310, 1
      %v2312 = vadd.f32 %v2310, %v2311
      %v2313 = vadd.f32 %v2277, %v2278
      %v2314 = vrot.slane %v2313, 4
      %v2315 = vadd.f32 %v2313, %v2314
      %v2316 = vrot.slane %v2315, 2
      %v2317 = vadd.f32 %v2315, %v2316
      %v2318 = vrot.slane %v2317, 1
      %v2319 = vadd.f32 %v2317, %v2318
      %v2320 = vadd.f32 %v2279, %v2280
      %v2321 = vrot.slane %v2320, 4
      %v2322 = vadd.f32 %v2320, %v2321
      %v2323 = vrot.slane %v2322, 2
      %v2324 = vadd.f32 %v2322, %v2323
      %v2325 = vrot.slane %v2324, 1
      %v2326 = vadd.f32 %v2324, %v2325
      %v2327 = vadd.f32 %v2281, %v2282
      %v2328 = vrot.slane %v2327, 4
      %v2329 = vadd.f32 %v2327, %v2328
      %v2330 = vrot.slane %v2329, 2
      %v2331 = vadd.f32 %v2329, %v2330
      %v2332 = vrot.slane %v2331, 1
      %v2333 = vadd.f32 %v2331, %v2332
      %v2334 = vadd.f32 %v2283, %v2284
      %v2335 = vrot.slane %v2334, 4
      %v2336 = vadd.f32 %v2334, %v2335
      %v2337 = vrot.slane %v2336, 2
      %v2338 = vadd.f32 %v2336, %v2337
      %v2339 = vrot.slane %v2338, 1
      %v2340 = vadd.f32 %v2338, %v2339
      %v2341 = vmul.f32 %v2291, %v1011
      %v2342 = vmul.f32 %v2298, %v1011
      %v2343 = vmul.f32 %v2305, %v1011
      %v2344 = vmul.f32 %v2312, %v1011
      %v2345 = vmul.f32 %v2319, %v1011
      %v2346 = vmul.f32 %v2326, %v1011
      %v2347 = vmul.f32 %v2333, %v1011
      %v2348 = vmul.f32 %v2340, %v1011
      %v2349 = vpack.c.bf16 %v2341, %v2341
      %v2350 = vpack.c.bf16 %v2342, %v2342
      %v2351 = vpack.c.bf16 %v2343, %v2343
      %v2352 = vpack.c.bf16 %v2344, %v2344
      %v2353 = vpack.c.bf16 %v2345, %v2345
      %v2354 = vpack.c.bf16 %v2346, %v2346
      %v2355 = vpack.c.bf16 %v2347, %v2347
      %v2356 = vpack.c.bf16 %v2348, %v2348
      %v2357 = vld [vmem:[%s7] sm:$0xf]
      %v2358 = vld [vmem:[%s7 + $0x4] sm:$0xf]
      %v2359 = vld [vmem:[%s7 + $0x8] sm:$0xf]
      %v2360 = vld [vmem:[%s7 + $0xc] sm:$0xf]
      %v2361 = vld [vmem:[%s7 + $0x10] sm:$0xf]
      %v2362 = vld [vmem:[%s7 + $0x14] sm:$0xf]
      %v2363 = vld [vmem:[%s7 + $0x18] sm:$0xf]
      %v2364 = vld [vmem:[%s7 + $0x1c] sm:$0xf]
      %v2365 = vld [vmem:[%s7 + $0x20] sm:$0xf]
      %v2366 = vld [vmem:[%s7 + $0x24] sm:$0xf]
      %v2367 = vld [vmem:[%s7 + $0x28] sm:$0xf]
      %v2368 = vld [vmem:[%s7 + $0x2c] sm:$0xf]
      %v2369 = vld [vmem:[%s7 + $0x30] sm:$0xf]
      %v2370 = vld [vmem:[%s7 + $0x34] sm:$0xf]
      %v2371 = vld [vmem:[%s7 + $0x38] sm:$0xf]
      %v2372 = vld [vmem:[%s7 + $0x3c] sm:$0xf]
      %v2373 = vld [vmem:[%s8] sm:$0x1]
      %v2375 = vlaneseq
      %v2376 = vshrl.u32 %v2375, 7
      %v2377 = vsub.s32 0, %v2376
      %v2378 = vrot.slane %v2373, %v2377
      %v2388 = vunpack.c.l.b16 %v2349
      %v2389 = vunpack.c.l.b16 %v2350
      %v2390 = vunpack.c.l.b16 %v2351
      %v2391 = vunpack.c.l.b16 %v2352
      %v2392 = vunpack.c.l.b16 %v2353
      %v2393 = vunpack.c.l.b16 %v2354
      %v2394 = vunpack.c.l.b16 %v2355
      %v2395 = vunpack.c.l.b16 %v2356
      %vm2396 = vcmask 1041409
      %v2397 = vsel %vm2396, %v2389, %v2388
      %vm2398 = vcmask 1042434
      %v2399 = vsel %vm2398, %v2390, %v2397
      %vm2400 = vcmask 1043459
      %v2401 = vsel %vm2400, %v2391, %v2399
      %vm2402 = vcmask 1044484
      %v2403 = vsel %vm2402, %v2392, %v2401
      %vm2404 = vcmask 1045509
      %v2405 = vsel %vm2404, %v2393, %v2403
      %vm2406 = vcmask 1046534
      %v2407 = vsel %vm2406, %v2394, %v2405
      %vm2408 = vcmask 1047559
      %v2409 = vsel %vm2408, %v2395, %v2407
      %v2410 = vpack.c.b16 %v2409, %v2409
      %v2428 = vunpack.c.l.b16 %v2357
      %v2429 = vunpack.c.l.b16 %v2358
      %v2430 = vunpack.c.l.b16 %v2359
      %v2431 = vunpack.c.l.b16 %v2360
      %v2432 = vunpack.c.l.b16 %v2361
      %v2433 = vunpack.c.l.b16 %v2362
      %v2434 = vunpack.c.l.b16 %v2363
      %v2435 = vunpack.c.l.b16 %v2364
      %v2436 = vunpack.c.l.b16 %v2365
      %v2437 = vunpack.c.l.b16 %v2366
      %v2438 = vunpack.c.l.b16 %v2367
      %v2439 = vunpack.c.l.b16 %v2368
      %v2440 = vunpack.c.l.b16 %v2369
      %v2441 = vunpack.c.l.b16 %v2370
      %v2442 = vunpack.c.l.b16 %v2371
      %v2443 = vunpack.c.l.b16 %v2372
      %v2444 = vpack.c.b16 %v2429, %v2428
      %v2445 = vpack.c.b16 %v2431, %v2430
      %v2446 = vpack.c.b16 %v2433, %v2432
      %v2447 = vpack.c.b16 %v2435, %v2434
      %v2448 = vpack.c.b16 %v2437, %v2436
      %v2449 = vpack.c.b16 %v2439, %v2438
      %v2450 = vpack.c.b16 %v2441, %v2440
      %v2451 = vpack.c.b16 %v2443, %v2442
      %2460 = vmatprep.subr.bf16.mxu0 0
      %2461 = vmatpush1.bf16.msra.mxu0 %v2451
      %2462 = vmatprep.subr.bf16.mxu0 0
      %2463 = vmatpush1.bf16.msra.mxu0 %v2450
      %2464 = vmatprep.subr.bf16.mxu0 0
      %2465 = vmatpush1.bf16.msra.mxu0 %v2449
      %2466 = vmatprep.subr.bf16.mxu0 0
      %2467 = vmatpush1.bf16.msra.mxu0 %v2448
      %2468 = vmatprep.subr.bf16.mxu0 0
      %2469 = vmatpush1.bf16.msra.mxu0 %v2447
      %2470 = vmatprep.subr.bf16.mxu0 0
      %2471 = vmatpush1.bf16.msra.mxu0 %v2446
      %2472 = vmatprep.subr.bf16.mxu0 0
      %2473 = vmatpush1.bf16.msra.mxu0 %v2445
      %2474 = vmatprep.subr.bf16.mxu0 0
      %2475 = vmatpush1.bf16.msra.mxu0 %v2444
      %2476 = vmatprep.subr.bf16.mxu0 0
      %2477 = vmatpush2.bf16.msra.mxu0 0
      %2478 = vmatprep.subr.bf16.mxu0 0
      %2479 = vmatpush2.bf16.msra.mxu0 0
      %2480 = vmatprep.subr.bf16.mxu0 0
      %2481 = vmatpush2.bf16.msra.mxu0 0
      %2482 = vmatprep.subr.bf16.mxu0 0
      %2483 = vmatpush2.bf16.msra.mxu0 0
      %2484 = vmatprep.subr.bf16.mxu0 0
      %2485 = vmatpush2.bf16.msra.mxu0 0
      %2486 = vmatprep.subr.bf16.mxu0 0
      %2487 = vmatpush2.bf16.msra.mxu0 0
      %2488 = vmatprep.subr.bf16.mxu0 0
      %2489 = vmatpush2.bf16.msra.mxu0 0
      %2490 = vmatprep.subr.bf16.mxu0 0
      %2491 = vmatpush2.bf16.msra.mxu0 0
      %2492 = vmatprep.mubr.bf16.mxu0 0
      %2493 = vmatmul.mubr.bf16.gmra.mxu0 %v2410
      %v2494 = vpop.f32.mrf.mxu0
      %v2495 = vadd.f32 %v2378, %v2494
      %v2496 = vpop.f32.mrf.mxu0
      %v2497 = vpop.f32.mrf.mxu0
      %v2498 = vpop.f32.mrf.mxu0
      %2499 = vdwg.mxu0
      %2500 = vst [vmem:[%s335] sm:$0xff] %v2495
      %p2501 = scmp.lt.s32.totalorder %s20, 1
      %s2502 = scalar_select %p2501, %s20, 1
      %s2503 = smul.addr %s2502, 8
      %s2504 = scalar_lea.vmem %s9, %s2503
      // Predicated region
      $region57: #{classification_forward.1} parent=55 // pred_check
        %p2505 = pneg %p232
      $region58: #{classification_forward.1} parent=55 // pred_check_branch
        %2507 = sbr.rel (%p2505) target = $region60
      $region59: #{classification_forward.1} parent=55 // pred_region
        _
      $region60: #{classification_forward.1} parent=55 // pred_fallthru
        _
    $region56: #{classification_forward.1} parent=5 // pred_fallthru
      _
    %p2508 = scmp.le.s32.totalorder 2, %s15
    // Predicated region
    $region61: #{classification_forward.1} parent=5 // pred_check
      %p2509 = pneg %p2508
    $region62: #{classification_forward.1} parent=5 // pred_check_branch
      %2511 = sbr.rel (%p2509) target = $region64
    $region63: #{classification_forward.1} parent=5 // pred_region
      %s2512 = ssub.s32 %s15, 2
      // Predicated region
      $region65: #{classification_forward.1} parent=63 // pred_check
        %p2513 = pneg %p238
      $region66: #{classification_forward.1} parent=63 // pred_check_branch
        %2515 = sbr.rel (%p2513) target = $region68
      $region67: #{classification_forward.1} parent=63 // pred_region
        %p2516 = scmp.lt.s32.totalorder %s21, 1
        %s2517 = scalar_select %p2516, %s21, 1
        %s2518 = smul.addr %s2517, 8
        %s2519 = scalar_lea.vmem %s9, %s2518
      $region68: #{classification_forward.1} parent=63 // pred_fallthru
        _
    $region64: #{classification_forward.1} parent=5 // pred_fallthru
      _
  $region6: #{classification_forward.1} parent=0 // loop_footer
    %s19 = sadd.s32 1, %s15
  $region7: #{classification_forward.1} parent=0 // loop_footer_branch
    %14 = sbr.rel target = $region3
  $region8: #{classification_forward.1} parent=0 // loop_exit
    _

</llo_original>
